<compile_context>
chip_gen: v5e
topology: v5e:2x2
jax: 0.10.0
libtpu: 0.0.40
codegen_flags: <defaults>
</compile_context>

<pallas_src>
import math

import jax
import jax.numpy as jnp
from jax import lax
from jax.experimental import pallas as pl
from jax.experimental.pallas import tpu as pltpu

# ---------------- small synthetic BERT config ----------------
B = 2                 # batch
S = 8                 # max_seq_length
H = 32                # hidden_size
NH = 2                # attention heads
DH = H // NH          # head dim
INTER = 64            # intermediate size
L = 2                 # encoder layers
VOCAB = 50
NUM_LABELS = 3
NUM_NER_LABELS = 5
NPAD = 128            # lane-dense padded width for both heads' logits
LN_EPS = 1e-12
BS = B * S
NEG_BIG = -1.0e9      # pad-column bias -> exp() underflows to exactly 0

# rows of the packed per-layer vector slab (L, NVEC, INTER)
(R_BQ, R_BK, R_BV, R_BO, R_G1, R_BE1, R_BF1, R_BF2, R_G2, R_BE2) = range(10)
NVEC = 10


def _layer_norm(x, g, b):
    mu = jnp.mean(x, axis=-1, keepdims=True)
    var = jnp.mean((x - mu) ** 2, axis=-1, keepdims=True)
    return (x - mu) * lax.rsqrt(var + LN_EPS) * g + b


def _gelu(x):
    # TODO(synk): HF BERT uses exact erf-GELU; tanh approximation used here (EUP-friendly).
    c = math.sqrt(2.0 / math.pi)
    return 0.5 * x * (1.0 + jnp.tanh(c * (x + 0.044715 * x * x * x)))


# ---------------- one fused kernel: encoder + heads + losses ----------------
def tabsa_fused_kernel(x_ref, mask_ref, wqkv_ref, wo_ref, w1_ref, w2_ref,
                       vecs_ref, head_w_ref, head_b_ref, oh_ref, out_ref):
    mask = mask_ref[...]                          # (NH*B, S, S) additive bias, head-major
    scale = 1.0 / math.sqrt(DH)

    def split_heads(t):
        # (BS, H) -> (NH*B, S, DH): heads stacked along the leading batch axis
        return jnp.concatenate(
            [t[:, hd * DH:(hd + 1) * DH].reshape(B, S, DH) for hd in range(NH)],
            axis=0)

    # ---- transformer encoder: unrolled layer loop, (B*S, H) carry ----
    def layer_body(l, h):
        vecs = vecs_ref[l]                         # (NVEC, INTER): one load per layer
        bq = vecs[R_BQ:R_BQ + 1, :H]
        bk = vecs[R_BK:R_BK + 1, :H]
        bv = vecs[R_BV:R_BV + 1, :H]
        bo = vecs[R_BO:R_BO + 1, :H]
        g1, be1 = vecs[R_G1:R_G1 + 1, :H], vecs[R_BE1:R_BE1 + 1, :H]
        bf1 = vecs[R_BF1:R_BF1 + 1, :]
        bf2 = vecs[R_BF2:R_BF2 + 1, :H]
        g2, be2 = vecs[R_G2:R_G2 + 1, :H], vecs[R_BE2:R_BE2 + 1, :H]

        # fused QKV projection: one (BS,H)@(H,3H) MXU push
        qkv = jnp.dot(h, wqkv_ref[l], preferred_element_type=jnp.float32)   # (BS, 3H)
        q = split_heads(qkv[:, 0 * H:1 * H] + bq)                           # (NH*B, S, DH)
        k = split_heads(qkv[:, 1 * H:2 * H] + bk)
        v = split_heads(qkv[:, 2 * H:3 * H] + bv)

        # one batched scores / PV contraction for ALL heads
        s = jnp.einsum('bqd,bkd->bqk', q, k,
                       preferred_element_type=jnp.float32) * scale + mask   # (NH*B, S, S)
        s = s - jnp.max(s, axis=-1, keepdims=True)
        p = jnp.exp(s)
        p = p * pl.reciprocal(jnp.sum(p, axis=-1, keepdims=True), approx=True)
        ctx = jnp.einsum('bqk,bkd->bqd', p, v,
                         preferred_element_type=jnp.float32)                # (NH*B, S, DH)
        # merge heads back onto the lane axis and do ONE output projection
        ctx2d = jnp.concatenate(
            [ctx[hd * B:(hd + 1) * B].reshape(BS, DH) for hd in range(NH)], axis=-1)
        attn = jnp.dot(ctx2d, wo_ref[l], preferred_element_type=jnp.float32) + bo

        h1 = _layer_norm(h + attn, g1, be1)
        inter = _gelu(jnp.dot(h1, w1_ref[l], preferred_element_type=jnp.float32) + bf1)
        ffn = jnp.dot(inter, w2_ref[l], preferred_element_type=jnp.float32) + bf2
        return _layer_norm(h1 + ffn, g2, be2)

    h = lax.fori_loop(0, L, layer_body, x_ref[...].astype(jnp.float32), unroll=True)

    # ---- heads ----
    # pooled_output = sequence_output[:, 0, :]  -> one slice of the reshaped slab
    pooled = h.reshape(B, S, H)[:, 0:1, :].reshape(B, H)
    logits = (jnp.dot(pooled, head_w_ref[0], preferred_element_type=jnp.float32)
              + head_b_ref[0:1, :])                                          # (B, 128)
    ner_logits = (jnp.dot(h, head_w_ref[1], preferred_element_type=jnp.float32)
                  + head_b_ref[1:2, :])                                      # (BS, 128)

    # ---- losses from wrapper-precomputed one-hots (no SMEM scalar chain) ----
    oh = oh_ref[...]                               # (B+BS, 128)
    oh_cls = oh[0:B, :]                            # (B, 128) sentiment one-hot
    oh_ner = oh[B:B + BS, :]                       # (BS, 128), zeroed where label==0

    # CrossEntropyLoss() over sentiment logits (mean over batch)
    lsm = logits - jnp.max(logits, axis=-1, keepdims=True)
    lsm = lsm - jnp.log(jnp.sum(jnp.exp(lsm), axis=-1, keepdims=True))
    cls_nll = -jnp.sum(oh_cls * lsm, axis=-1, keepdims=True)                 # (B, 1)
    loss_val = jnp.sum(cls_nll, axis=0, keepdims=True) / float(B)            # (1, 1)

    # CrossEntropyLoss(ignore_index=0) over NER logits (exact division, den==0 guarded)
    nlsm = ner_logits - jnp.max(ner_logits, axis=-1, keepdims=True)
    nlsm = nlsm - jnp.log(jnp.sum(jnp.exp(nlsm), axis=-1, keepdims=True))
    ner_nll = -jnp.sum(oh_ner * nlsm, axis=-1, keepdims=True)                # (BS, 1)
    num = jnp.sum(ner_nll, axis=0, keepdims=True)                            # (1, 1)
    den = jnp.sum(jnp.sum(oh_ner, axis=-1, keepdims=True), axis=0, keepdims=True)
    nloss_val = num / jnp.maximum(den, 1.0)                                  # (1, 1)

    # ---- single merged lane-dense output slab ----
    lane = lax.broadcasted_iota(jnp.int32, (1, NPAD), 1)
    loss_row = jnp.where(lane == 0, loss_val, jnp.where(lane == 1, nloss_val, 0.0))
    out_ref[...] = jnp.concatenate([loss_row, logits, ner_logits], axis=0)   # (1+B+BS, 128)


def bert_tabsa_forward(x2d, mask_bias, pk, onehots):
    vmem = pl.BlockSpec(memory_space=pltpu.MemorySpace.VMEM)
    out = pl.pallas_call(
        tabsa_fused_kernel,
        out_shape=jax.ShapeDtypeStruct((1 + B + BS, NPAD), jnp.float32),
        in_specs=[vmem] * 10,
        out_specs=vmem,
        compiler_params=pltpu.CompilerParams(vmem_limit_bytes=32 * 1024 * 1024),
    )(x2d, mask_bias, pk['wqkv'], pk['wo'], pk['w1'], pk['w2'],
      pk['vecs'], pk['head_w'], pk['head_b'], onehots)

    loss = out[0, 0]
    ner_loss = out[0, 1]
    logits = out[1:1 + B, :NUM_LABELS]
    ner_logits = out[1 + B:1 + B + BS, :NUM_NER_LABELS].reshape(B, S, NUM_NER_LABELS)
    return loss, ner_loss, logits, ner_logits


# ---------------- plain-JAX glue: embeddings + params ----------------
def embed(input_ids, token_type_ids, p):
    # TODO(synk): embedding gather (word/pos/type lookup) kept in plain JAX (glue).
    x = (p['word_emb'][input_ids]
         + p['pos_emb'][None, :, :]
         + p['type_emb'][token_type_ids])
    mu = jnp.mean(x, axis=-1, keepdims=True)
    var = jnp.mean((x - mu) ** 2, axis=-1, keepdims=True)
    return (x - mu) * lax.rsqrt(var + LN_EPS) * p['emb_g'] + p['emb_b']


def init_params(key):
    keys = iter(jax.random.split(key, 48))

    def nrm(shape):
        return 0.02 * jax.random.normal(next(keys), shape, jnp.float32)

    return dict(
        word_emb=nrm((VOCAB, H)),
        pos_emb=nrm((S, H)),
        type_emb=nrm((2, H)),
        emb_g=jnp.ones((H,), jnp.float32),
        emb_b=jnp.zeros((H,), jnp.float32),
        wq=nrm((L, H, H)), bq=jnp.zeros((L, 1, H), jnp.float32),
        wk=nrm((L, H, H)), bk=jnp.zeros((L, 1, H), jnp.float32),
        wv=nrm((L, H, H)), bv=jnp.zeros((L, 1, H), jnp.float32),
        wo=nrm((L, H, H)), bo=jnp.zeros((L, 1, H), jnp.float32),
        g1=jnp.ones((L, 1, H), jnp.float32), be1=jnp.zeros((L, 1, H), jnp.float32),
        w1=nrm((L, H, INTER)), bf1=jnp.zeros((L, 1, INTER), jnp.float32),
        w2=nrm((L, INTER, H)), bf2=jnp.zeros((L, 1, H), jnp.float32),
        g2=jnp.ones((L, 1, H), jnp.float32), be2=jnp.zeros((L, 1, H), jnp.float32),
        cls_w=nrm((H, NUM_LABELS)), cls_b=jnp.zeros((NUM_LABELS,), jnp.float32),
        ner_w=nrm((H, NUM_NER_LABELS)), ner_b=jnp.zeros((NUM_NER_LABELS,), jnp.float32),
    )


def pack_params(p):
    """Wrapper-side layout plumbing: fuse QKV, pack per-layer vectors, pad heads."""
    wqkv = jnp.concatenate([p['wq'], p['wk'], p['wv']], axis=-1)         # (L, H, 3H)

    def pad_vec(v):                                                       # (L,1,H)->(L,1,INTER)
        return jnp.pad(v, ((0, 0), (0, 0), (0, INTER - H)))

    # packed per-layer vector slab: rows bq,bk,bv,bo,g1,be1,bf1,bf2,g2,be2
    vecs = jnp.concatenate([
        pad_vec(p['bq']), pad_vec(p['bk']), pad_vec(p['bv']), pad_vec(p['bo']),
        pad_vec(p['g1']), pad_vec(p['be1']),
        p['bf1'],
        pad_vec(p['bf2']), pad_vec(p['g2']), pad_vec(p['be2']),
    ], axis=1)                                                            # (L, NVEC, INTER)

    def pad_head(w, b, n):
        w_pad = jnp.zeros((H, NPAD), jnp.float32).at[:, :n].set(w)
        # pad columns get a huge negative bias -> exp underflows to exactly 0,
        # so the in-kernel softmax/cross-entropy over the padded slab is exact.
        b_pad = jnp.full((NPAD,), NEG_BIG, jnp.float32).at[:n].set(b)
        return w_pad, b_pad

    cw, cb = pad_head(p['cls_w'], p['cls_b'], NUM_LABELS)
    nw, nb = pad_head(p['ner_w'], p['ner_b'], NUM_NER_LABELS)
    head_w = jnp.stack([cw, nw], axis=0)                                  # (2, H, 128)
    head_b = jnp.stack([cb, nb], axis=0)                                  # (2, 128)

    return dict(wqkv=wqkv, wo=p['wo'], w1=p['w1'], w2=p['w2'],
                vecs=vecs, head_w=head_w, head_b=head_b)


def build_onehots(labels, ner_labels_flat):
    """Precompute CE one-hots in the wrapper; NER rows pre-masked by label != 0."""
    oh_cls = jax.nn.one_hot(labels, NPAD, dtype=jnp.float32)              # (B, 128)
    valid = (ner_labels_flat != 0).astype(jnp.float32)[:, None]
    oh_ner = jax.nn.one_hot(ner_labels_flat, NPAD, dtype=jnp.float32) * valid
    return jnp.concatenate([oh_cls, oh_ner], axis=0)                      # (B+BS, 128)


if __name__ == "__main__":
    key = jax.random.PRNGKey(0)
    pkey, ikey = jax.random.split(key)
    params = init_params(pkey)
    packed = pack_params(params)

    input_ids = jax.random.randint(ikey, (B, S), 0, VOCAB, dtype=jnp.int32)
    token_type_ids = jnp.concatenate(
        [jnp.zeros((B, S // 2), jnp.int32), jnp.ones((B, S // 2), jnp.int32)], axis=1)
    attention_mask = jnp.array([[1, 1, 1, 1, 1, 1, 1, 1],
                                [1, 1, 1, 1, 1, 1, 0, 0]], jnp.float32)
    labels = jnp.array([1, 2], jnp.int32)
    ner_labels = jnp.array([[0, 1, 2, 0, 3, 0, 4, 1],
                            [2, 0, 1, 1, 0, 3, 0, 2]], jnp.int32)

    # TODO(synk): dropout layers of the reference are omitted (eval/inference mode).
    x = embed(input_ids, token_type_ids, params)                          # (B, S, H)
    x2d = x.reshape(BS, H).astype(jnp.float32)                            # 2-D slab

    base_mask = jnp.broadcast_to(
        (1.0 - attention_mask)[:, None, :] * -10000.0, (B, S, S)).astype(jnp.float32)
    mask_bias = jnp.tile(base_mask, (NH, 1, 1))                           # (NH*B, S, S), head-major

    onehots = build_onehots(labels, ner_labels.reshape(BS))

    loss, ner_loss, logits, ner_logits = bert_tabsa_forward(x2d, mask_bias, packed, onehots)

    jax.block_until_ready((loss, ner_loss, logits, ner_logits))
    print("KERNEL_OK")
</pallas_src>

<mosaic_0001>
module attributes {stable_mosaic.version = 11 : i64} {
  func.func @tabsa_fused_kernel(%arg0: memref<16x32xf32, #tpu.memory_space<vmem>>, %arg1: memref<4x8x8xf32, #tpu.memory_space<vmem>>, %arg2: memref<2x32x96xf32, #tpu.memory_space<vmem>>, %arg3: memref<2x32x32xf32, #tpu.memory_space<vmem>>, %arg4: memref<2x32x64xf32, #tpu.memory_space<vmem>>, %arg5: memref<2x64x32xf32, #tpu.memory_space<vmem>>, %arg6: memref<2x10x64xf32, #tpu.memory_space<vmem>>, %arg7: memref<2x32x128xf32, #tpu.memory_space<vmem>>, %arg8: memref<2x128xf32, #tpu.memory_space<vmem>>, %arg9: memref<18x128xf32, #tpu.memory_space<vmem>>, %arg10: memref<19x128xf32, #tpu.memory_space<vmem>>) attributes {dimension_semantics = [], scalar_prefetch = 0 : i64, scratch_operands = 0 : i64, tpu.core_type = #tpu.core_type<tc>} {
    %c0 = arith.constant 0 : index
    %c0_0 = arith.constant 0 : index
    %c0_1 = arith.constant 0 : index
    %0 = vector.load %arg1[%c0, %c0_0, %c0_1] : memref<4x8x8xf32, #tpu.memory_space<vmem>>, vector<4x8x8xf32>
    %c0_2 = arith.constant 0 : index
    %c0_3 = arith.constant 0 : index
    %1 = vector.load %arg0[%c0_2, %c0_3] : memref<16x32xf32, #tpu.memory_space<vmem>>, vector<16x32xf32>
    %c0_i32 = arith.constant 0 : i32
    %2 = arith.index_cast %c0_i32 : i32 to index
    %c0_4 = arith.constant 0 : index
    %c0_5 = arith.constant 0 : index
    %3 = vector.load %arg6[%2, %c0_4, %c0_5] : memref<2x10x64xf32, #tpu.memory_space<vmem>>, vector<1x10x64xf32>
    %4 = vector.shape_cast %3 : vector<1x10x64xf32> to vector<10x64xf32>
    %5 = vector.extract_strided_slice %4 {offsets = [0, 0], sizes = [1, 32], strides = [1, 1]} : vector<10x64xf32> to vector<1x32xf32>
    %6 = vector.extract_strided_slice %4 {offsets = [1, 0], sizes = [1, 32], strides = [1, 1]} : vector<10x64xf32> to vector<1x32xf32>
    %7 = vector.extract_strided_slice %4 {offsets = [2, 0], sizes = [1, 32], strides = [1, 1]} : vector<10x64xf32> to vector<1x32xf32>
    %8 = vector.extract_strided_slice %4 {offsets = [3, 0], sizes = [1, 32], strides = [1, 1]} : vector<10x64xf32> to vector<1x32xf32>
    %9 = vector.extract_strided_slice %4 {offsets = [4, 0], sizes = [1, 32], strides = [1, 1]} : vector<10x64xf32> to vector<1x32xf32>
    %10 = vector.extract_strided_slice %4 {offsets = [5, 0], sizes = [1, 32], strides = [1, 1]} : vector<10x64xf32> to vector<1x32xf32>
    %11 = vector.extract_strided_slice %4 {offsets = [6, 0], sizes = [1, 64], strides = [1, 1]} : vector<10x64xf32> to vector<1x64xf32>
    %12 = vector.extract_strided_slice %4 {offsets = [7, 0], sizes = [1, 32], strides = [1, 1]} : vector<10x64xf32> to vector<1x32xf32>
    %13 = vector.extract_strided_slice %4 {offsets = [8, 0], sizes = [1, 32], strides = [1, 1]} : vector<10x64xf32> to vector<1x32xf32>
    %14 = vector.extract_strided_slice %4 {offsets = [9, 0], sizes = [1, 32], strides = [1, 1]} : vector<10x64xf32> to vector<1x32xf32>
    %15 = arith.index_cast %c0_i32 : i32 to index
    %c0_6 = arith.constant 0 : index
    %c0_7 = arith.constant 0 : index
    %16 = vector.load %arg2[%15, %c0_6, %c0_7] : memref<2x32x96xf32, #tpu.memory_space<vmem>>, vector<1x32x96xf32>
    %17 = vector.shape_cast %16 : vector<1x32x96xf32> to vector<32x96xf32>
    %cst = arith.constant dense<0.000000e+00> : vector<16x96xf32>
    %18 = tpu.matmul %1, %17, %cst {dimension_numbers = #tpu.dot_dimension_numbers<[1], [0], [0], [1], [0, 0, 1, 1], [], []>} : vector<16x32xf32>, vector<32x96xf32>, vector<16x96xf32> -> vector<16x96xf32>
    %19 = vector.extract_strided_slice %18 {offsets = [0, 0], sizes = [16, 32], strides = [1, 1]} : vector<16x96xf32> to vector<16x32xf32>
    %20 = vector.broadcast %5 : vector<1x32xf32> to vector<16x32xf32>
    %21 = arith.addf %19, %20 : vector<16x32xf32>
    %22 = vector.extract_strided_slice %21 {offsets = [0, 0], sizes = [16, 16], strides = [1, 1]} : vector<16x32xf32> to vector<16x16xf32>
    %23 = vector.shape_cast %22 : vector<16x16xf32> to vector<2x8x16xf32>
    %24 = vector.extract_strided_slice %21 {offsets = [0, 16], sizes = [16, 16], strides = [1, 1]} : vector<16x32xf32> to vector<16x16xf32>
    %25 = vector.shape_cast %24 : vector<16x16xf32> to vector<2x8x16xf32>
    %26 = tpu.concatenate %23, %25 in 0 : vector<2x8x16xf32>, vector<2x8x16xf32> -> vector<4x8x16xf32>
    %27 = vector.extract_strided_slice %18 {offsets = [0, 32], sizes = [16, 32], strides = [1, 1]} : vector<16x96xf32> to vector<16x32xf32>
    %28 = vector.broadcast %6 : vector<1x32xf32> to vector<16x32xf32>
    %29 = arith.addf %27, %28 : vector<16x32xf32>
    %30 = vector.extract_strided_slice %29 {offsets = [0, 0], sizes = [16, 16], strides = [1, 1]} : vector<16x32xf32> to vector<16x16xf32>
    %31 = vector.shape_cast %30 : vector<16x16xf32> to vector<2x8x16xf32>
    %32 = vector.extract_strided_slice %29 {offsets = [0, 16], sizes = [16, 16], strides = [1, 1]} : vector<16x32xf32> to vector<16x16xf32>
    %33 = vector.shape_cast %32 : vector<16x16xf32> to vector<2x8x16xf32>
    %34 = tpu.concatenate %31, %33 in 0 : vector<2x8x16xf32>, vector<2x8x16xf32> -> vector<4x8x16xf32>
    %35 = vector.extract_strided_slice %18 {offsets = [0, 64], sizes = [16, 32], strides = [1, 1]} : vector<16x96xf32> to vector<16x32xf32>
    %36 = vector.broadcast %7 : vector<1x32xf32> to vector<16x32xf32>
    %37 = arith.addf %35, %36 : vector<16x32xf32>
    %38 = vector.extract_strided_slice %37 {offsets = [0, 0], sizes = [16, 16], strides = [1, 1]} : vector<16x32xf32> to vector<16x16xf32>
    %39 = vector.shape_cast %38 : vector<16x16xf32> to vector<2x8x16xf32>
    %40 = vector.extract_strided_slice %37 {offsets = [0, 16], sizes = [16, 16], strides = [1, 1]} : vector<16x32xf32> to vector<16x16xf32>
    %41 = vector.shape_cast %40 : vector<16x16xf32> to vector<2x8x16xf32>
    %42 = tpu.concatenate %39, %41 in 0 : vector<2x8x16xf32>, vector<2x8x16xf32> -> vector<4x8x16xf32>
    "tpu.trace_start"() <{level = 10 : i32, message = "bqd,bkd->bqk"}> : () -> ()
    %cst_8 = arith.constant dense<0.000000e+00> : vector<4x8x8xf32>
    %43 = tpu.matmul %26, %34, %cst_8 {dimension_numbers = #tpu.dot_dimension_numbers<[2], [2], [1], [1], [0, 0, 0, 1, 1, 1], [0], [0]>} : vector<4x8x16xf32>, vector<4x8x16xf32>, vector<4x8x8xf32> -> vector<4x8x8xf32>
    "tpu.trace_stop"() : () -> ()
    %cst_9 = arith.constant 2.500000e-01 : f32
    %44 = vector.broadcast %cst_9 : f32 to vector<4x8x8xf32>
    %45 = arith.mulf %43, %44 : vector<4x8x8xf32>
    %46 = arith.addf %45, %0 : vector<4x8x8xf32>
    %cst_10 = arith.constant dense<0xFF800000> : vector<4x8xf32>
    %47 = vector.multi_reduction <maximumf>, %46, %cst_10 [2] : vector<4x8x8xf32> to vector<4x8xf32>
    %48 = vector.shape_cast %47 : vector<4x8xf32> to vector<4x8x1xf32>
    %49 = vector.broadcast %48 : vector<4x8x1xf32> to vector<4x8x8xf32>
    %50 = arith.subf %46, %49 : vector<4x8x8xf32>
    %51 = math.exp %50 : vector<4x8x8xf32>
    %cst_11 = arith.constant dense<0.000000e+00> : vector<4x8xf32>
    %52 = vector.multi_reduction <add>, %51, %cst_11 [2] : vector<4x8x8xf32> to vector<4x8xf32>
    %53 = vector.shape_cast %52 : vector<4x8xf32> to vector<4x8x1xf32>
    %54 = tpu.reciprocal %53 {approx = true} : vector<4x8x1xf32> -> vector<4x8x1xf32>
    %55 = vector.broadcast %54 : vector<4x8x1xf32> to vector<4x8x8xf32>
    %56 = arith.mulf %51, %55 : vector<4x8x8xf32>
    "tpu.trace_start"() <{level = 10 : i32, message = "bqk,bkd->bqd"}> : () -> ()
    %cst_12 = arith.constant dense<0.000000e+00> : vector<4x8x16xf32>
    %57 = tpu.matmul %56, %42, %cst_12 {dimension_numbers = #tpu.dot_dimension_numbers<[2], [1], [1], [2], [0, 0, 0, 1, 1, 2], [0], [0]>} : vector<4x8x8xf32>, vector<4x8x16xf32>, vector<4x8x16xf32> -> vector<4x8x16xf32>
    "tpu.trace_stop"() : () -> ()
    %58 = vector.extract_strided_slice %57 {offsets = [0, 0, 0], sizes = [2, 8, 16], strides = [1, 1, 1]} : vector<4x8x16xf32> to vector<2x8x16xf32>
    %59 = vector.shape_cast %58 : vector<2x8x16xf32> to vector<16x16xf32>
    %60 = vector.extract_strided_slice %57 {offsets = [2, 0, 0], sizes = [2, 8, 16], strides = [1, 1, 1]} : vector<4x8x16xf32> to vector<2x8x16xf32>
    %61 = vector.shape_cast %60 : vector<2x8x16xf32> to vector<16x16xf32>
    %62 = tpu.concatenate %59, %61 in 1 : vector<16x16xf32>, vector<16x16xf32> -> vector<16x32xf32>
    %63 = arith.index_cast %c0_i32 : i32 to index
    %c0_13 = arith.constant 0 : index
    %c0_14 = arith.constant 0 : index
    %64 = vector.load %arg3[%63, %c0_13, %c0_14] : memref<2x32x32xf32, #tpu.memory_space<vmem>>, vector<1x32x32xf32>
    %65 = vector.shape_cast %64 : vector<1x32x32xf32> to vector<32x32xf32>
    %cst_15 = arith.constant dense<0.000000e+00> : vector<16x32xf32>
    %66 = tpu.matmul %62, %65, %cst_15 {dimension_numbers = #tpu.dot_dimension_numbers<[1], [0], [0], [1], [0, 0, 1, 1], [], []>} : vector<16x32xf32>, vector<32x32xf32>, vector<16x32xf32> -> vector<16x32xf32>
    %67 = vector.broadcast %8 : vector<1x32xf32> to vector<16x32xf32>
    %68 = arith.addf %66, %67 : vector<16x32xf32>
    %69 = arith.addf %1, %68 : vector<16x32xf32>
    %cst_16 = arith.constant dense<0.000000e+00> : vector<16xf32>
    %70 = vector.multi_reduction <add>, %69, %cst_16 [1] : vector<16x32xf32> to vector<16xf32>
    %71 = vector.shape_cast %70 : vector<16xf32> to vector<16x1xf32>
    %cst_17 = arith.constant 3.200000e+01 : f32
    %72 = vector.broadcast %cst_17 : f32 to vector<16x1xf32>
    %73 = arith.divf %71, %72 : vector<16x1xf32>
    %74 = vector.broadcast %73 : vector<16x1xf32> to vector<16x32xf32>
    %75 = arith.subf %69, %74 : vector<16x32xf32>
    %76 = arith.mulf %75, %75 : vector<16x32xf32>
    %cst_18 = arith.constant dense<0.000000e+00> : vector<16xf32>
    %77 = vector.multi_reduction <add>, %76, %cst_18 [1] : vector<16x32xf32> to vector<16xf32>
    %78 = vector.shape_cast %77 : vector<16xf32> to vector<16x1xf32>
    %cst_19 = arith.constant 3.200000e+01 : f32
    %79 = vector.broadcast %cst_19 : f32 to vector<16x1xf32>
    %80 = arith.divf %78, %79 : vector<16x1xf32>
    %81 = vector.broadcast %73 : vector<16x1xf32> to vector<16x32xf32>
    %82 = arith.subf %69, %81 : vector<16x32xf32>
    %cst_20 = arith.constant 9.99999996E-13 : f32
    %83 = vector.broadcast %cst_20 : f32 to vector<16x1xf32>
    %84 = arith.addf %80, %83 : vector<16x1xf32>
    %85 = math.rsqrt %84 : vector<16x1xf32>
    %86 = vector.broadcast %85 : vector<16x1xf32> to vector<16x32xf32>
    %87 = arith.mulf %82, %86 : vector<16x32xf32>
    %88 = vector.broadcast %9 : vector<1x32xf32> to vector<16x32xf32>
    %89 = arith.mulf %87, %88 : vector<16x32xf32>
    %90 = vector.broadcast %10 : vector<1x32xf32> to vector<16x32xf32>
    %91 = arith.addf %89, %90 : vector<16x32xf32>
    %92 = arith.index_cast %c0_i32 : i32 to index
    %c0_21 = arith.constant 0 : index
    %c0_22 = arith.constant 0 : index
    %93 = vector.load %arg4[%92, %c0_21, %c0_22] : memref<2x32x64xf32, #tpu.memory_space<vmem>>, vector<1x32x64xf32>
    %94 = vector.shape_cast %93 : vector<1x32x64xf32> to vector<32x64xf32>
    %cst_23 = arith.constant dense<0.000000e+00> : vector<16x64xf32>
    %95 = tpu.matmul %91, %94, %cst_23 {dimension_numbers = #tpu.dot_dimension_numbers<[1], [0], [0], [1], [0, 0, 1, 1], [], []>} : vector<16x32xf32>, vector<32x64xf32>, vector<16x64xf32> -> vector<16x64xf32>
    %96 = vector.broadcast %11 : vector<1x64xf32> to vector<16x64xf32>
    %97 = arith.addf %95, %96 : vector<16x64xf32>
    %cst_24 = arith.constant 5.000000e-01 : f32
    %98 = vector.broadcast %cst_24 : f32 to vector<16x64xf32>
    %99 = arith.mulf %98, %97 : vector<16x64xf32>
    %cst_25 = arith.constant 4.471500e-02 : f32
    %100 = vector.broadcast %cst_25 : f32 to vector<16x64xf32>
    %101 = arith.mulf %100, %97 : vector<16x64xf32>
    %102 = arith.mulf %101, %97 : vector<16x64xf32>
    %103 = arith.mulf %102, %97 : vector<16x64xf32>
    %104 = arith.addf %97, %103 : vector<16x64xf32>
    %cst_26 = arith.constant 0.797884583 : f32
    %105 = vector.broadcast %cst_26 : f32 to vector<16x64xf32>
    %106 = arith.mulf %105, %104 : vector<16x64xf32>
    %107 = math.tanh %106 : vector<16x64xf32>
    %cst_27 = arith.constant 1.000000e+00 : f32
    %108 = vector.broadcast %cst_27 : f32 to vector<16x64xf32>
    %109 = arith.addf %108, %107 : vector<16x64xf32>
    %110 = arith.mulf %99, %109 : vector<16x64xf32>
    %111 = arith.index_cast %c0_i32 : i32 to index
    %c0_28 = arith.constant 0 : index
    %c0_29 = arith.constant 0 : index
    %112 = vector.load %arg5[%111, %c0_28, %c0_29] : memref<2x64x32xf32, #tpu.memory_space<vmem>>, vector<1x64x32xf32>
    %113 = vector.shape_cast %112 : vector<1x64x32xf32> to vector<64x32xf32>
    %cst_30 = arith.constant dense<0.000000e+00> : vector<16x32xf32>
    %114 = tpu.matmul %110, %113, %cst_30 {dimension_numbers = #tpu.dot_dimension_numbers<[1], [0], [0], [1], [0, 0, 1, 1], [], []>} : vector<16x64xf32>, vector<64x32xf32>, vector<16x32xf32> -> vector<16x32xf32>
    %115 = vector.broadcast %12 : vector<1x32xf32> to vector<16x32xf32>
    %116 = arith.addf %114, %115 : vector<16x32xf32>
    %117 = arith.addf %91, %116 : vector<16x32xf32>
    %cst_31 = arith.constant dense<0.000000e+00> : vector<16xf32>
    %118 = vector.multi_reduction <add>, %117, %cst_31 [1] : vector<16x32xf32> to vector<16xf32>
    %119 = vector.shape_cast %118 : vector<16xf32> to vector<16x1xf32>
    %cst_32 = arith.constant 3.200000e+01 : f32
    %120 = vector.broadcast %cst_32 : f32 to vector<16x1xf32>
    %121 = arith.divf %119, %120 : vector<16x1xf32>
    %122 = vector.broadcast %121 : vector<16x1xf32> to vector<16x32xf32>
    %123 = arith.subf %117, %122 : vector<16x32xf32>
    %124 = arith.mulf %123, %123 : vector<16x32xf32>
    %cst_33 = arith.constant dense<0.000000e+00> : vector<16xf32>
    %125 = vector.multi_reduction <add>, %124, %cst_33 [1] : vector<16x32xf32> to vector<16xf32>
    %126 = vector.shape_cast %125 : vector<16xf32> to vector<16x1xf32>
    %cst_34 = arith.constant 3.200000e+01 : f32
    %127 = vector.broadcast %cst_34 : f32 to vector<16x1xf32>
    %128 = arith.divf %126, %127 : vector<16x1xf32>
    %129 = vector.broadcast %121 : vector<16x1xf32> to vector<16x32xf32>
    %130 = arith.subf %117, %129 : vector<16x32xf32>
    %cst_35 = arith.constant 9.99999996E-13 : f32
    %131 = vector.broadcast %cst_35 : f32 to vector<16x1xf32>
    %132 = arith.addf %128, %131 : vector<16x1xf32>
    %133 = math.rsqrt %132 : vector<16x1xf32>
    %134 = vector.broadcast %133 : vector<16x1xf32> to vector<16x32xf32>
    %135 = arith.mulf %130, %134 : vector<16x32xf32>
    %136 = vector.broadcast %13 : vector<1x32xf32> to vector<16x32xf32>
    %137 = arith.mulf %135, %136 : vector<16x32xf32>
    %138 = vector.broadcast %14 : vector<1x32xf32> to vector<16x32xf32>
    %139 = arith.addf %137, %138 : vector<16x32xf32>
    %c1_i32 = arith.constant 1 : i32
    %140 = arith.index_cast %c1_i32 : i32 to index
    %c0_36 = arith.constant 0 : index
    %c0_37 = arith.constant 0 : index
    %141 = vector.load %arg6[%140, %c0_36, %c0_37] : memref<2x10x64xf32, #tpu.memory_space<vmem>>, vector<1x10x64xf32>
    %142 = vector.shape_cast %141 : vector<1x10x64xf32> to vector<10x64xf32>
    %143 = vector.extract_strided_slice %142 {offsets = [0, 0], sizes = [1, 32], strides = [1, 1]} : vector<10x64xf32> to vector<1x32xf32>
    %144 = vector.extract_strided_slice %142 {offsets = [1, 0], sizes = [1, 32], strides = [1, 1]} : vector<10x64xf32> to vector<1x32xf32>
    %145 = vector.extract_strided_slice %142 {offsets = [2, 0], sizes = [1, 32], strides = [1, 1]} : vector<10x64xf32> to vector<1x32xf32>
    %146 = vector.extract_strided_slice %142 {offsets = [3, 0], sizes = [1, 32], strides = [1, 1]} : vector<10x64xf32> to vector<1x32xf32>
    %147 = vector.extract_strided_slice %142 {offsets = [4, 0], sizes = [1, 32], strides = [1, 1]} : vector<10x64xf32> to vector<1x32xf32>
    %148 = vector.extract_strided_slice %142 {offsets = [5, 0], sizes = [1, 32], strides = [1, 1]} : vector<10x64xf32> to vector<1x32xf32>
    %149 = vector.extract_strided_slice %142 {offsets = [6, 0], sizes = [1, 64], strides = [1, 1]} : vector<10x64xf32> to vector<1x64xf32>
    %150 = vector.extract_strided_slice %142 {offsets = [7, 0], sizes = [1, 32], strides = [1, 1]} : vector<10x64xf32> to vector<1x32xf32>
    %151 = vector.extract_strided_slice %142 {offsets = [8, 0], sizes = [1, 32], strides = [1, 1]} : vector<10x64xf32> to vector<1x32xf32>
    %152 = vector.extract_strided_slice %142 {offsets = [9, 0], sizes = [1, 32], strides = [1, 1]} : vector<10x64xf32> to vector<1x32xf32>
    %153 = arith.index_cast %c1_i32 : i32 to index
    %c0_38 = arith.constant 0 : index
    %c0_39 = arith.constant 0 : index
    %154 = vector.load %arg2[%153, %c0_38, %c0_39] : memref<2x32x96xf32, #tpu.memory_space<vmem>>, vector<1x32x96xf32>
    %155 = vector.shape_cast %154 : vector<1x32x96xf32> to vector<32x96xf32>
    %cst_40 = arith.constant dense<0.000000e+00> : vector<16x96xf32>
    %156 = tpu.matmul %139, %155, %cst_40 {dimension_numbers = #tpu.dot_dimension_numbers<[1], [0], [0], [1], [0, 0, 1, 1], [], []>} : vector<16x32xf32>, vector<32x96xf32>, vector<16x96xf32> -> vector<16x96xf32>
    %157 = vector.extract_strided_slice %156 {offsets = [0, 0], sizes = [16, 32], strides = [1, 1]} : vector<16x96xf32> to vector<16x32xf32>
    %158 = vector.broadcast %143 : vector<1x32xf32> to vector<16x32xf32>
    %159 = arith.addf %157, %158 : vector<16x32xf32>
    %160 = vector.extract_strided_slice %159 {offsets = [0, 0], sizes = [16, 16], strides = [1, 1]} : vector<16x32xf32> to vector<16x16xf32>
    %161 = vector.shape_cast %160 : vector<16x16xf32> to vector<2x8x16xf32>
    %162 = vector.extract_strided_slice %159 {offsets = [0, 16], sizes = [16, 16], strides = [1, 1]} : vector<16x32xf32> to vector<16x16xf32>
    %163 = vector.shape_cast %162 : vector<16x16xf32> to vector<2x8x16xf32>
    %164 = tpu.concatenate %161, %163 in 0 : vector<2x8x16xf32>, vector<2x8x16xf32> -> vector<4x8x16xf32>
    %165 = vector.extract_strided_slice %156 {offsets = [0, 32], sizes = [16, 32], strides = [1, 1]} : vector<16x96xf32> to vector<16x32xf32>
    %166 = vector.broadcast %144 : vector<1x32xf32> to vector<16x32xf32>
    %167 = arith.addf %165, %166 : vector<16x32xf32>
    %168 = vector.extract_strided_slice %167 {offsets = [0, 0], sizes = [16, 16], strides = [1, 1]} : vector<16x32xf32> to vector<16x16xf32>
    %169 = vector.shape_cast %168 : vector<16x16xf32> to vector<2x8x16xf32>
    %170 = vector.extract_strided_slice %167 {offsets = [0, 16], sizes = [16, 16], strides = [1, 1]} : vector<16x32xf32> to vector<16x16xf32>
    %171 = vector.shape_cast %170 : vector<16x16xf32> to vector<2x8x16xf32>
    %172 = tpu.concatenate %169, %171 in 0 : vector<2x8x16xf32>, vector<2x8x16xf32> -> vector<4x8x16xf32>
    %173 = vector.extract_strided_slice %156 {offsets = [0, 64], sizes = [16, 32], strides = [1, 1]} : vector<16x96xf32> to vector<16x32xf32>
    %174 = vector.broadcast %145 : vector<1x32xf32> to vector<16x32xf32>
    %175 = arith.addf %173, %174 : vector<16x32xf32>
    %176 = vector.extract_strided_slice %175 {offsets = [0, 0], sizes = [16, 16], strides = [1, 1]} : vector<16x32xf32> to vector<16x16xf32>
    %177 = vector.shape_cast %176 : vector<16x16xf32> to vector<2x8x16xf32>
    %178 = vector.extract_strided_slice %175 {offsets = [0, 16], sizes = [16, 16], strides = [1, 1]} : vector<16x32xf32> to vector<16x16xf32>
    %179 = vector.shape_cast %178 : vector<16x16xf32> to vector<2x8x16xf32>
    %180 = tpu.concatenate %177, %179 in 0 : vector<2x8x16xf32>, vector<2x8x16xf32> -> vector<4x8x16xf32>
    "tpu.trace_start"() <{level = 10 : i32, message = "bqd,bkd->bqk"}> : () -> ()
    %cst_41 = arith.constant dense<0.000000e+00> : vector<4x8x8xf32>
    %181 = tpu.matmul %164, %172, %cst_41 {dimension_numbers = #tpu.dot_dimension_numbers<[2], [2], [1], [1], [0, 0, 0, 1, 1, 1], [0], [0]>} : vector<4x8x16xf32>, vector<4x8x16xf32>, vector<4x8x8xf32> -> vector<4x8x8xf32>
    "tpu.trace_stop"() : () -> ()
    %cst_42 = arith.constant 2.500000e-01 : f32
    %182 = vector.broadcast %cst_42 : f32 to vector<4x8x8xf32>
    %183 = arith.mulf %181, %182 : vector<4x8x8xf32>
    %184 = arith.addf %183, %0 : vector<4x8x8xf32>
    %cst_43 = arith.constant dense<0xFF800000> : vector<4x8xf32>
    %185 = vector.multi_reduction <maximumf>, %184, %cst_43 [2] : vector<4x8x8xf32> to vector<4x8xf32>
    %186 = vector.shape_cast %185 : vector<4x8xf32> to vector<4x8x1xf32>
    %187 = vector.broadcast %186 : vector<4x8x1xf32> to vector<4x8x8xf32>
    %188 = arith.subf %184, %187 : vector<4x8x8xf32>
    %189 = math.exp %188 : vector<4x8x8xf32>
    %cst_44 = arith.constant dense<0.000000e+00> : vector<4x8xf32>
    %190 = vector.multi_reduction <add>, %189, %cst_44 [2] : vector<4x8x8xf32> to vector<4x8xf32>
    %191 = vector.shape_cast %190 : vector<4x8xf32> to vector<4x8x1xf32>
    %192 = tpu.reciprocal %191 {approx = true} : vector<4x8x1xf32> -> vector<4x8x1xf32>
    %193 = vector.broadcast %192 : vector<4x8x1xf32> to vector<4x8x8xf32>
    %194 = arith.mulf %189, %193 : vector<4x8x8xf32>
    "tpu.trace_start"() <{level = 10 : i32, message = "bqk,bkd->bqd"}> : () -> ()
    %cst_45 = arith.constant dense<0.000000e+00> : vector<4x8x16xf32>
    %195 = tpu.matmul %194, %180, %cst_45 {dimension_numbers = #tpu.dot_dimension_numbers<[2], [1], [1], [2], [0, 0, 0, 1, 1, 2], [0], [0]>} : vector<4x8x8xf32>, vector<4x8x16xf32>, vector<4x8x16xf32> -> vector<4x8x16xf32>
    "tpu.trace_stop"() : () -> ()
    %196 = vector.extract_strided_slice %195 {offsets = [0, 0, 0], sizes = [2, 8, 16], strides = [1, 1, 1]} : vector<4x8x16xf32> to vector<2x8x16xf32>
    %197 = vector.shape_cast %196 : vector<2x8x16xf32> to vector<16x16xf32>
    %198 = vector.extract_strided_slice %195 {offsets = [2, 0, 0], sizes = [2, 8, 16], strides = [1, 1, 1]} : vector<4x8x16xf32> to vector<2x8x16xf32>
    %199 = vector.shape_cast %198 : vector<2x8x16xf32> to vector<16x16xf32>
    %200 = tpu.concatenate %197, %199 in 1 : vector<16x16xf32>, vector<16x16xf32> -> vector<16x32xf32>
    %201 = arith.index_cast %c1_i32 : i32 to index
    %c0_46 = arith.constant 0 : index
    %c0_47 = arith.constant 0 : index
    %202 = vector.load %arg3[%201, %c0_46, %c0_47] : memref<2x32x32xf32, #tpu.memory_space<vmem>>, vector<1x32x32xf32>
    %203 = vector.shape_cast %202 : vector<1x32x32xf32> to vector<32x32xf32>
    %cst_48 = arith.constant dense<0.000000e+00> : vector<16x32xf32>
    %204 = tpu.matmul %200, %203, %cst_48 {dimension_numbers = #tpu.dot_dimension_numbers<[1], [0], [0], [1], [0, 0, 1, 1], [], []>} : vector<16x32xf32>, vector<32x32xf32>, vector<16x32xf32> -> vector<16x32xf32>
    %205 = vector.broadcast %146 : vector<1x32xf32> to vector<16x32xf32>
    %206 = arith.addf %204, %205 : vector<16x32xf32>
    %207 = arith.addf %139, %206 : vector<16x32xf32>
    %cst_49 = arith.constant dense<0.000000e+00> : vector<16xf32>
    %208 = vector.multi_reduction <add>, %207, %cst_49 [1] : vector<16x32xf32> to vector<16xf32>
    %209 = vector.shape_cast %208 : vector<16xf32> to vector<16x1xf32>
    %cst_50 = arith.constant 3.200000e+01 : f32
    %210 = vector.broadcast %cst_50 : f32 to vector<16x1xf32>
    %211 = arith.divf %209, %210 : vector<16x1xf32>
    %212 = vector.broadcast %211 : vector<16x1xf32> to vector<16x32xf32>
    %213 = arith.subf %207, %212 : vector<16x32xf32>
    %214 = arith.mulf %213, %213 : vector<16x32xf32>
    %cst_51 = arith.constant dense<0.000000e+00> : vector<16xf32>
    %215 = vector.multi_reduction <add>, %214, %cst_51 [1] : vector<16x32xf32> to vector<16xf32>
    %216 = vector.shape_cast %215 : vector<16xf32> to vector<16x1xf32>
    %cst_52 = arith.constant 3.200000e+01 : f32
    %217 = vector.broadcast %cst_52 : f32 to vector<16x1xf32>
    %218 = arith.divf %216, %217 : vector<16x1xf32>
    %219 = vector.broadcast %211 : vector<16x1xf32> to vector<16x32xf32>
    %220 = arith.subf %207, %219 : vector<16x32xf32>
    %cst_53 = arith.constant 9.99999996E-13 : f32
    %221 = vector.broadcast %cst_53 : f32 to vector<16x1xf32>
    %222 = arith.addf %218, %221 : vector<16x1xf32>
    %223 = math.rsqrt %222 : vector<16x1xf32>
    %224 = vector.broadcast %223 : vector<16x1xf32> to vector<16x32xf32>
    %225 = arith.mulf %220, %224 : vector<16x32xf32>
    %226 = vector.broadcast %147 : vector<1x32xf32> to vector<16x32xf32>
    %227 = arith.mulf %225, %226 : vector<16x32xf32>
    %228 = vector.broadcast %148 : vector<1x32xf32> to vector<16x32xf32>
    %229 = arith.addf %227, %228 : vector<16x32xf32>
    %230 = arith.index_cast %c1_i32 : i32 to index
    %c0_54 = arith.constant 0 : index
    %c0_55 = arith.constant 0 : index
    %231 = vector.load %arg4[%230, %c0_54, %c0_55] : memref<2x32x64xf32, #tpu.memory_space<vmem>>, vector<1x32x64xf32>
    %232 = vector.shape_cast %231 : vector<1x32x64xf32> to vector<32x64xf32>
    %cst_56 = arith.constant dense<0.000000e+00> : vector<16x64xf32>
    %233 = tpu.matmul %229, %232, %cst_56 {dimension_numbers = #tpu.dot_dimension_numbers<[1], [0], [0], [1], [0, 0, 1, 1], [], []>} : vector<16x32xf32>, vector<32x64xf32>, vector<16x64xf32> -> vector<16x64xf32>
    %234 = vector.broadcast %149 : vector<1x64xf32> to vector<16x64xf32>
    %235 = arith.addf %233, %234 : vector<16x64xf32>
    %cst_57 = arith.constant 5.000000e-01 : f32
    %236 = vector.broadcast %cst_57 : f32 to vector<16x64xf32>
    %237 = arith.mulf %236, %235 : vector<16x64xf32>
    %cst_58 = arith.constant 4.471500e-02 : f32
    %238 = vector.broadcast %cst_58 : f32 to vector<16x64xf32>
    %239 = arith.mulf %238, %235 : vector<16x64xf32>
    %240 = arith.mulf %239, %235 : vector<16x64xf32>
    %241 = arith.mulf %240, %235 : vector<16x64xf32>
    %242 = arith.addf %235, %241 : vector<16x64xf32>
    %cst_59 = arith.constant 0.797884583 : f32
    %243 = vector.broadcast %cst_59 : f32 to vector<16x64xf32>
    %244 = arith.mulf %243, %242 : vector<16x64xf32>
    %245 = math.tanh %244 : vector<16x64xf32>
    %cst_60 = arith.constant 1.000000e+00 : f32
    %246 = vector.broadcast %cst_60 : f32 to vector<16x64xf32>
    %247 = arith.addf %246, %245 : vector<16x64xf32>
    %248 = arith.mulf %237, %247 : vector<16x64xf32>
    %249 = arith.index_cast %c1_i32 : i32 to index
    %c0_61 = arith.constant 0 : index
    %c0_62 = arith.constant 0 : index
    %250 = vector.load %arg5[%249, %c0_61, %c0_62] : memref<2x64x32xf32, #tpu.memory_space<vmem>>, vector<1x64x32xf32>
    %251 = vector.shape_cast %250 : vector<1x64x32xf32> to vector<64x32xf32>
    %cst_63 = arith.constant dense<0.000000e+00> : vector<16x32xf32>
    %252 = tpu.matmul %248, %251, %cst_63 {dimension_numbers = #tpu.dot_dimension_numbers<[1], [0], [0], [1], [0, 0, 1, 1], [], []>} : vector<16x64xf32>, vector<64x32xf32>, vector<16x32xf32> -> vector<16x32xf32>
    %253 = vector.broadcast %150 : vector<1x32xf32> to vector<16x32xf32>
    %254 = arith.addf %252, %253 : vector<16x32xf32>
    %255 = arith.addf %229, %254 : vector<16x32xf32>
    %cst_64 = arith.constant dense<0.000000e+00> : vector<16xf32>
    %256 = vector.multi_reduction <add>, %255, %cst_64 [1] : vector<16x32xf32> to vector<16xf32>
    %257 = vector.shape_cast %256 : vector<16xf32> to vector<16x1xf32>
    %cst_65 = arith.constant 3.200000e+01 : f32
    %258 = vector.broadcast %cst_65 : f32 to vector<16x1xf32>
    %259 = arith.divf %257, %258 : vector<16x1xf32>
    %260 = vector.broadcast %259 : vector<16x1xf32> to vector<16x32xf32>
    %261 = arith.subf %255, %260 : vector<16x32xf32>
    %262 = arith.mulf %261, %261 : vector<16x32xf32>
    %cst_66 = arith.constant dense<0.000000e+00> : vector<16xf32>
    %263 = vector.multi_reduction <add>, %262, %cst_66 [1] : vector<16x32xf32> to vector<16xf32>
    %264 = vector.shape_cast %263 : vector<16xf32> to vector<16x1xf32>
    %cst_67 = arith.constant 3.200000e+01 : f32
    %265 = vector.broadcast %cst_67 : f32 to vector<16x1xf32>
    %266 = arith.divf %264, %265 : vector<16x1xf32>
    %267 = vector.broadcast %259 : vector<16x1xf32> to vector<16x32xf32>
    %268 = arith.subf %255, %267 : vector<16x32xf32>
    %cst_68 = arith.constant 9.99999996E-13 : f32
    %269 = vector.broadcast %cst_68 : f32 to vector<16x1xf32>
    %270 = arith.addf %266, %269 : vector<16x1xf32>
    %271 = math.rsqrt %270 : vector<16x1xf32>
    %272 = vector.broadcast %271 : vector<16x1xf32> to vector<16x32xf32>
    %273 = arith.mulf %268, %272 : vector<16x32xf32>
    %274 = vector.broadcast %151 : vector<1x32xf32> to vector<16x32xf32>
    %275 = arith.mulf %273, %274 : vector<16x32xf32>
    %276 = vector.broadcast %152 : vector<1x32xf32> to vector<16x32xf32>
    %277 = arith.addf %275, %276 : vector<16x32xf32>
    %c2_i32 = arith.constant 2 : i32
    %278 = vector.shape_cast %277 : vector<16x32xf32> to vector<2x8x32xf32>
    %279 = vector.extract_strided_slice %278 {offsets = [0, 0, 0], sizes = [2, 1, 32], strides = [1, 1, 1]} : vector<2x8x32xf32> to vector<2x1x32xf32>
    %280 = vector.shape_cast %279 : vector<2x1x32xf32> to vector<2x32xf32>
    %c0_69 = arith.constant 0 : index
    %c0_70 = arith.constant 0 : index
    %c0_71 = arith.constant 0 : index
    %281 = vector.load %arg7[%c0_69, %c0_70, %c0_71] : memref<2x32x128xf32, #tpu.memory_space<vmem>>, vector<1x32x128xf32>
    %282 = vector.shape_cast %281 : vector<1x32x128xf32> to vector<32x128xf32>
    %cst_72 = arith.constant dense<0.000000e+00> : vector<2x128xf32>
    %283 = tpu.matmul %280, %282, %cst_72 {dimension_numbers = #tpu.dot_dimension_numbers<[1], [0], [0], [1], [0, 0, 1, 1], [], []>} : vector<2x32xf32>, vector<32x128xf32>, vector<2x128xf32> -> vector<2x128xf32>
    %c0_73 = arith.constant 0 : index
    %c0_74 = arith.constant 0 : index
    %284 = vector.load %arg8[%c0_73, %c0_74] : memref<2x128xf32, #tpu.memory_space<vmem>>, vector<1x128xf32>
    %285 = vector.broadcast %284 : vector<1x128xf32> to vector<2x128xf32>
    %286 = arith.addf %283, %285 : vector<2x128xf32>
    %c1 = arith.constant 1 : index
    %c0_75 = arith.constant 0 : index
    %c0_76 = arith.constant 0 : index
    %287 = vector.load %arg7[%c1, %c0_75, %c0_76] : memref<2x32x128xf32, #tpu.memory_space<vmem>>, vector<1x32x128xf32>
    %288 = vector.shape_cast %287 : vector<1x32x128xf32> to vector<32x128xf32>
    %cst_77 = arith.constant dense<0.000000e+00> : vector<16x128xf32>
    %289 = tpu.matmul %277, %288, %cst_77 {dimension_numbers = #tpu.dot_dimension_numbers<[1], [0], [0], [1], [0, 0, 1, 1], [], []>} : vector<16x32xf32>, vector<32x128xf32>, vector<16x128xf32> -> vector<16x128xf32>
    %c1_78 = arith.constant 1 : index
    %c0_79 = arith.constant 0 : index
    %290 = vector.load %arg8[%c1_78, %c0_79] : memref<2x128xf32, #tpu.memory_space<vmem>>, vector<1x128xf32>
    %291 = vector.broadcast %290 : vector<1x128xf32> to vector<16x128xf32>
    %292 = arith.addf %289, %291 : vector<16x128xf32>
    %c0_80 = arith.constant 0 : index
    %c0_81 = arith.constant 0 : index
    %293 = vector.load %arg9[%c0_80, %c0_81] : memref<18x128xf32, #tpu.memory_space<vmem>>, vector<18x128xf32>
    %294 = vector.extract_strided_slice %293 {offsets = [0, 0], sizes = [2, 128], strides = [1, 1]} : vector<18x128xf32> to vector<2x128xf32>
    %295 = vector.extract_strided_slice %293 {offsets = [2, 0], sizes = [16, 128], strides = [1, 1]} : vector<18x128xf32> to vector<16x128xf32>
    %cst_82 = arith.constant dense<0xFF800000> : vector<2xf32>
    %296 = vector.multi_reduction <maximumf>, %286, %cst_82 [1] : vector<2x128xf32> to vector<2xf32>
    %297 = vector.shape_cast %296 : vector<2xf32> to vector<2x1xf32>
    %298 = vector.broadcast %297 : vector<2x1xf32> to vector<2x128xf32>
    %299 = arith.subf %286, %298 : vector<2x128xf32>
    %300 = math.exp %299 : vector<2x128xf32>
    %cst_83 = arith.constant dense<0.000000e+00> : vector<2xf32>
    %301 = vector.multi_reduction <add>, %300, %cst_83 [1] : vector<2x128xf32> to vector<2xf32>
    %302 = vector.shape_cast %301 : vector<2xf32> to vector<2x1xf32>
    %303 = math.log %302 : vector<2x1xf32>
    %304 = vector.broadcast %303 : vector<2x1xf32> to vector<2x128xf32>
    %305 = arith.subf %299, %304 : vector<2x128xf32>
    %306 = arith.mulf %294, %305 : vector<2x128xf32>
    %cst_84 = arith.constant dense<0.000000e+00> : vector<2xf32>
    %307 = vector.multi_reduction <add>, %306, %cst_84 [1] : vector<2x128xf32> to vector<2xf32>
    %308 = vector.shape_cast %307 : vector<2xf32> to vector<2x1xf32>
    %cst_85 = arith.constant 0.000000e+00 : f32
    %309 = vector.broadcast %cst_85 : f32 to vector<2x1xf32>
    %310 = arith.subf %309, %308 : vector<2x1xf32>
    %cst_86 = arith.constant dense<0.000000e+00> : vector<1xf32>
    %311 = vector.multi_reduction <add>, %310, %cst_86 [0] : vector<2x1xf32> to vector<1xf32>
    %312 = vector.shape_cast %311 : vector<1xf32> to vector<1x1xf32>
    %cst_87 = arith.constant 2.000000e+00 : f32
    %313 = vector.broadcast %cst_87 : f32 to vector<1x1xf32>
    %314 = arith.divf %312, %313 : vector<1x1xf32>
    %cst_88 = arith.constant dense<0xFF800000> : vector<16xf32>
    %315 = vector.multi_reduction <maximumf>, %292, %cst_88 [1] : vector<16x128xf32> to vector<16xf32>
    %316 = vector.shape_cast %315 : vector<16xf32> to vector<16x1xf32>
    %317 = vector.broadcast %316 : vector<16x1xf32> to vector<16x128xf32>
    %318 = arith.subf %292, %317 : vector<16x128xf32>
    %319 = math.exp %318 : vector<16x128xf32>
    %cst_89 = arith.constant dense<0.000000e+00> : vector<16xf32>
    %320 = vector.multi_reduction <add>, %319, %cst_89 [1] : vector<16x128xf32> to vector<16xf32>
    %321 = vector.shape_cast %320 : vector<16xf32> to vector<16x1xf32>
    %322 = math.log %321 : vector<16x1xf32>
    %323 = vector.broadcast %322 : vector<16x1xf32> to vector<16x128xf32>
    %324 = arith.subf %318, %323 : vector<16x128xf32>
    %325 = arith.mulf %295, %324 : vector<16x128xf32>
    %cst_90 = arith.constant dense<0.000000e+00> : vector<16xf32>
    %326 = vector.multi_reduction <add>, %325, %cst_90 [1] : vector<16x128xf32> to vector<16xf32>
    %327 = vector.shape_cast %326 : vector<16xf32> to vector<16x1xf32>
    %cst_91 = arith.constant 0.000000e+00 : f32
    %328 = vector.broadcast %cst_91 : f32 to vector<16x1xf32>
    %329 = arith.subf %328, %327 : vector<16x1xf32>
    %cst_92 = arith.constant dense<0.000000e+00> : vector<1xf32>
    %330 = vector.multi_reduction <add>, %329, %cst_92 [0] : vector<16x1xf32> to vector<1xf32>
    %331 = vector.shape_cast %330 : vector<1xf32> to vector<1x1xf32>
    %cst_93 = arith.constant dense<0.000000e+00> : vector<16xf32>
    %332 = vector.multi_reduction <add>, %295, %cst_93 [1] : vector<16x128xf32> to vector<16xf32>
    %333 = vector.shape_cast %332 : vector<16xf32> to vector<16x1xf32>
    %cst_94 = arith.constant dense<0.000000e+00> : vector<1xf32>
    %334 = vector.multi_reduction <add>, %333, %cst_94 [0] : vector<16x1xf32> to vector<1xf32>
    %335 = vector.shape_cast %334 : vector<1xf32> to vector<1x1xf32>
    %cst_95 = arith.constant 1.000000e+00 : f32
    %336 = vector.broadcast %cst_95 : f32 to vector<1x1xf32>
    %337 = arith.maximumf %335, %336 : vector<1x1xf32>
    %338 = arith.divf %331, %337 : vector<1x1xf32>
    %339 = tpu.iota {dimensions = array<i32: 1>} : vector<1x128xi32>
    %c0_i32_96 = arith.constant 0 : i32
    %340 = vector.broadcast %c0_i32_96 : i32 to vector<1x128xi32>
    %341 = arith.cmpi eq, %339, %340 : vector<1x128xi32>
    %c1_i32_97 = arith.constant 1 : i32
    %342 = vector.broadcast %c1_i32_97 : i32 to vector<1x128xi32>
    %343 = arith.cmpi eq, %339, %342 : vector<1x128xi32>
    %cst_98 = arith.constant 0.000000e+00 : f32
    %344 = vector.shape_cast %338 : vector<1x1xf32> to vector<1x1xf32>
    %345 = vector.broadcast %344 : vector<1x1xf32> to vector<1x128xf32>
    %346 = vector.broadcast %cst_98 : f32 to vector<1x128xf32>
    %347 = arith.select %343, %345, %346 : vector<1x128xi1>, vector<1x128xf32>
    %348 = vector.shape_cast %314 : vector<1x1xf32> to vector<1x1xf32>
    %349 = vector.broadcast %348 : vector<1x1xf32> to vector<1x128xf32>
    %350 = arith.select %341, %349, %347 : vector<1x128xi1>, vector<1x128xf32>
    %351 = tpu.concatenate %350, %286, %292 in 0 : vector<1x128xf32>, vector<2x128xf32>, vector<16x128xf32> -> vector<19x128xf32>
    %c0_99 = arith.constant 0 : index
    %c0_100 = arith.constant 0 : index
    %352 = vector.load %arg10[%c0_99, %c0_100] : memref<19x128xf32, #tpu.memory_space<vmem>>, vector<19x128xf32>
    tpu.vector_store %arg10[%c0_99, %c0_100], %351 {strides = array<i32>} : memref<19x128xf32, #tpu.memory_space<vmem>>, vector<19x128xf32>,
    return
  }
}

</mosaic_0001>

<llo_original>
// kernel: tpu_custom_call.1
$region0: #{tpu_custom_call.1}
  #allocation0 [shape = 'u32[]', space=smem, size = 0x4, offset = 0x4, fixed_abs, tag = 'smem constant byte address 0x4 - core index']
  #allocation1 [shape = 'u32[72,128]{1,0:T(1,128)}', space=vmem, size = 0x9000, scoped, tag = 'internal scratch']
  %s0 = inlined_call_operand.hbm [shape: f32[16,32], index: 0, kind: input, shape index: {}]
  %s1 = inlined_call_operand.vmem [shape: f32[4,8,8], index: 1, kind: input, shape index: {}]
  %s2 = inlined_call_operand.vmem [shape: f32[2,32,96], index: 2, kind: input, shape index: {}]
  %s3 = inlined_call_operand.vmem [shape: f32[2,32,32], index: 3, kind: input, shape index: {}]
  %s4 = inlined_call_operand.vmem [shape: f32[2,32,64], index: 4, kind: input, shape index: {}]
  %s5 = inlined_call_operand.vmem [shape: f32[2,64,32], index: 5, kind: input, shape index: {}]
  %s6 = inlined_call_operand.vmem [shape: f32[2,10,64], index: 6, kind: input, shape index: {}]
  %s7 = inlined_call_operand.hbm [shape: f32[2,32,128], index: 7, kind: input, shape index: {}]
  %s8 = inlined_call_operand.hbm [shape: f32[2,128], index: 8, kind: input, shape index: {}]
  %s9 = inlined_call_operand.vmem [shape: f32[18,128], index: 9, kind: input, shape index: {}]
  %s10 = inlined_call_operand.hbm [shape: f32[19,128], index: 10, kind: output, shape index: {}]
  %s11 = sld [smem:[#allocation0]]
  $region62: #{tpu_custom_call.1} parent=0
    _
  %s13 = ssub.s32 1, %s11
  %s14 = scalar_select 0, %s13, %s11
  $region1: #{tpu_custom_call.1} parent=0
    #allocation2 [shape = 'u8[8192]{0}', space=vmem, size = 0x2000, scoped, tag = 'input window, operand 0, single buffered']
    #allocation3 [shape = 's32[1]{0}', space=sflag, size = 0x4, scoped, tag = 'scoped memory for tpu_custom_call.1']
    #allocation4 [shape = 's32[1]{0}', space=sflag, size = 0x4, scoped, tag = 'scoped memory for tpu_custom_call.1']
    #allocation5 [shape = 'u8[32768]{0}', space=vmem, size = 0x8000, scoped, tag = 'input window, operand 7, single buffered']
    #allocation6 [shape = 's32[1]{0}', space=sflag, size = 0x4, scoped, tag = 'scoped memory for tpu_custom_call.1']
    #allocation7 [shape = 'u8[1024]{0}', space=vmem, size = 0x400, scoped, tag = 'input window, operand 8, single buffered']
    #allocation8 [shape = 'u8[12288]{0}', space=vmem, size = 0x3000, scoped, tag = 'output window, operand 0, single buffered']
    %15 = vsyncpa [#allocation3], 0
    %16 = vsyncpa [#allocation6], 0
    %17 = vsyncpa [#allocation4], 0
    // Predicated region
    $region2: #{tpu_custom_call.1} parent=1 // pred_check
      _
    $region3: #{tpu_custom_call.1} parent=1 // pred_check_branch
      %19 = sbr.rel (0) target = $region5
    $region4: #{tpu_custom_call.1} parent=1 // pred_region
      %21 = vsyncadd [#allocation3], 0
      %s22 = sshll.u32 %s0, 4
      %s23 = int_to_ptr.hbm [resolvable:$true] %s22
      %s24 = sshll.u32 [#allocation2], 4
      %s25 = int_to_ptr.vmem [resolvable:$true] %s24
      %30 = dma.hbm_to_vmem [thread:$0]  %s23, 256, %s25, [#allocation3], 128, 128, 8
    $region5: #{tpu_custom_call.1} parent=1 // pred_fallthru
      _
    // Predicated region
    $region6: #{tpu_custom_call.1} parent=1 // pred_check
      _
    $region7: #{tpu_custom_call.1} parent=1 // pred_check_branch
      %32 = sbr.rel (0) target = $region9
    $region8: #{tpu_custom_call.1} parent=1 // pred_region
      _
    $region9: #{tpu_custom_call.1} parent=1 // pred_fallthru
      _
    // Predicated region
    $region10: #{tpu_custom_call.1} parent=1 // pred_check
      _
    $region11: #{tpu_custom_call.1} parent=1 // pred_check_branch
      %34 = sbr.rel (0) target = $region13
    $region12: #{tpu_custom_call.1} parent=1 // pred_region
      _
    $region13: #{tpu_custom_call.1} parent=1 // pred_fallthru
      _
    // Predicated region
    $region14: #{tpu_custom_call.1} parent=1 // pred_check
      _
    $region15: #{tpu_custom_call.1} parent=1 // pred_check_branch
      %36 = sbr.rel (0) target = $region17
    $region16: #{tpu_custom_call.1} parent=1 // pred_region
      _
    $region17: #{tpu_custom_call.1} parent=1 // pred_fallthru
      _
    // Predicated region
    $region18: #{tpu_custom_call.1} parent=1 // pred_check
      _
    $region19: #{tpu_custom_call.1} parent=1 // pred_check_branch
      %38 = sbr.rel (0) target = $region21
    $region20: #{tpu_custom_call.1} parent=1 // pred_region
      _
    $region21: #{tpu_custom_call.1} parent=1 // pred_fallthru
      _
    // Predicated region
    $region22: #{tpu_custom_call.1} parent=1 // pred_check
      _
    $region23: #{tpu_custom_call.1} parent=1 // pred_check_branch
      %40 = sbr.rel (0) target = $region25
    $region24: #{tpu_custom_call.1} parent=1 // pred_region
      _
    $region25: #{tpu_custom_call.1} parent=1 // pred_fallthru
      _
    // Predicated region
    $region26: #{tpu_custom_call.1} parent=1 // pred_check
      _
    $region27: #{tpu_custom_call.1} parent=1 // pred_check_branch
      %42 = sbr.rel (0) target = $region29
    $region28: #{tpu_custom_call.1} parent=1 // pred_region
      _
    $region29: #{tpu_custom_call.1} parent=1 // pred_fallthru
      _
    // Predicated region
    $region30: #{tpu_custom_call.1} parent=1 // pred_check
      _
    $region31: #{tpu_custom_call.1} parent=1 // pred_check_branch
      %44 = sbr.rel (0) target = $region33
    $region32: #{tpu_custom_call.1} parent=1 // pred_region
      %46 = vsyncadd [#allocation6], 0
      %s47 = sshll.u32 %s7, 4
      %s48 = int_to_ptr.hbm [resolvable:$true] %s47
      %s49 = sshll.u32 [#allocation5], 4
      %s50 = int_to_ptr.vmem [resolvable:$true] %s49
      %55 = dma.hbm_to_vmem [thread:$0]  %s48, 1024, %s50, [#allocation6], 128, 128, 8
    $region33: #{tpu_custom_call.1} parent=1 // pred_fallthru
      _
    // Predicated region
    $region34: #{tpu_custom_call.1} parent=1 // pred_check
      _
    $region35: #{tpu_custom_call.1} parent=1 // pred_check_branch
      %57 = sbr.rel (0) target = $region37
    $region36: #{tpu_custom_call.1} parent=1 // pred_region
      %59 = vsyncadd [#allocation6], 0
      %s61 = sshll.u32 %s8, 4
      %s62 = int_to_ptr.hbm [resolvable:$true] %s61
      %s63 = sshll.u32 [#allocation7], 4
      %s64 = int_to_ptr.vmem [resolvable:$true] %s63
      %66 = dma.hbm_to_vmem [thread:$0]  %s62, 32, %s64, [#allocation6]
    $region37: #{tpu_custom_call.1} parent=1 // pred_fallthru
      _
    // Predicated region
    $region38: #{tpu_custom_call.1} parent=1 // pred_check
      _
    $region39: #{tpu_custom_call.1} parent=1 // pred_check_branch
      %68 = sbr.rel (0) target = $region41
    $region40: #{tpu_custom_call.1} parent=1 // pred_region
      _
    $region41: #{tpu_custom_call.1} parent=1 // pred_fallthru
      _
    // Predicated region
    $region42: #{tpu_custom_call.1} parent=1 // pred_check
      _
    $region43: #{tpu_custom_call.1} parent=1 // pred_check_branch
      %70 = sbr.rel (0) target = $region45
    $region44: #{tpu_custom_call.1} parent=1 // pred_region
      %72 = dma.done [#allocation3], 256
    $region45: #{tpu_custom_call.1} parent=1 // pred_fallthru
      _
    // Predicated region
    $region46: #{tpu_custom_call.1} parent=1 // pred_check
      _
    $region47: #{tpu_custom_call.1} parent=1 // pred_check_branch
      %74 = sbr.rel (0) target = $region49
    $region48: #{tpu_custom_call.1} parent=1 // pred_region
      %76 = dma.done [#allocation6], 1024
    $region49: #{tpu_custom_call.1} parent=1 // pred_fallthru
      _
    // Predicated region
    $region50: #{tpu_custom_call.1} parent=1 // pred_check
      _
    $region51: #{tpu_custom_call.1} parent=1 // pred_check_branch
      %78 = sbr.rel (0) target = $region53
    $region52: #{tpu_custom_call.1} parent=1 // pred_region
      %80 = dma.done [#allocation6], 32
    $region53: #{tpu_custom_call.1} parent=1 // pred_fallthru
      _
    %v81 = vld [vmem:[%s1] sm:$0xff]
    %v82 = vld [vmem:[%s1 + $0x8] sm:$0xff]
    %v83 = vld [vmem:[%s1 + $0x10] sm:$0xff]
    %v84 = vld [vmem:[%s1 + $0x18] sm:$0xff]
    %v85 = vld [vmem:[#allocation2] sm:$0xff]
    %v86 = vld [vmem:[#allocation2 + $0x8] sm:$0xff]
    %v87 = vld [vmem:[%s6] sm:$0xff]
    %v88 = vld [vmem:[%s6 + $0x8] sm:$0x3]
    %v89 = vld [vmem:[%s2] sm:$0xff]
    %v90 = vld [vmem:[%s2 + $0x8] sm:$0xff]
    %v91 = vld [vmem:[%s2 + $0x10] sm:$0xff]
    %v92 = vld [vmem:[%s2 + $0x18] sm:$0xff]
    %vm93 = vcmask 261120
    %v95 = vsel %vm93, %v85, 0
    %v98 = vsel %vm93, %v86, 0
    %100 = vmatpush.msra.mxu0 0.0
    %101 = vmatpush.msra.mxu0 0.0
    %102 = vmatpush.msra.mxu0 0.0
    %103 = vmatpush.msra.mxu0 0.0
    %104 = vmatpush.msra.mxu0 0.0
    %105 = vmatpush.msra.mxu0 0.0
    %106 = vmatpush.msra.mxu0 0.0
    %107 = vmatpush.msra.mxu0 0.0
    %108 = vmatpush.msra.mxu0 0.0
    %109 = vmatpush.msra.mxu0 0.0
    %110 = vmatpush.msra.mxu0 0.0
    %111 = vmatpush.msra.mxu0 0.0
    %112 = vmatpush.msra.mxu0 %v92
    %113 = vmatpush.msra.mxu0 %v91
    %114 = vmatpush.msra.mxu0 %v90
    %115 = vmatpush.msra.mxu0 %v89
    %116 = vmatmul.f32.gmra.mxu0 %v95
    %v117 = vpop.f32.mrf.mxu0
    %v118 = vadd.f32 0.0, %v117
    %119 = vmatmul.f32.gmra.mxu0 %v98
    %v120 = vpop.f32.mrf.mxu0
    %v121 = vadd.f32 0.0, %v120
    %122 = vdwg.mxu0
    %v123 = vperm.slane %v87, 0
    %v124 = vadd.f32 %v118, %v123
    %v125 = vadd.f32 %v121, %v123
    %128 = vrot.lane.b32.xlu0 %v124, 112
    %v129 = vpop.permute.xlu0 %128
    %130 = vrot.lane.b32.xlu0 %v125, 112
    %v131 = vpop.permute.xlu0 %130
    %v132 = vperm.slane %v87, 1
    %134 = vrot.lane.b32.xlu0 %v132, 32
    %v135 = vpop.permute.xlu0 %134
    %v137 = vadd.f32 %v118, %v135
    %v138 = vadd.f32 %v121, %v135
    %141 = vrot.lane.b32.xlu0 %v137, 112
    %v142 = vpop.permute.xlu0 %141
    %143 = vrot.lane.b32.xlu0 %v138, 112
    %v144 = vpop.permute.xlu0 %143
    %v145 = vperm.slane %v87, 2
    %147 = vrot.lane.b32.xlu0 %v145, 64
    %v148 = vpop.permute.xlu0 %147
    %v150 = vadd.f32 %v118, %v148
    %v151 = vadd.f32 %v121, %v148
    %154 = vrot.lane.b32.xlu0 %v150, 112
    %v155 = vpop.permute.xlu0 %154
    %156 = vrot.lane.b32.xlu0 %v151, 112
    %v157 = vpop.permute.xlu0 %156
    %158 = vrot.lane.b32.xlu0 %v137, 96
    %v159 = vpop.permute.xlu0 %158
    %vm160 = vcmask 130048
    %v161 = vsel %vm160, %v124, 0
    %v163 = vsel %vm160, %v159, 0
    %165 = vmatpush.xpose.msra.mxu0 0.0
    %166 = vmatpush.xpose.msra.mxu0 0.0
    %167 = vmatpush.xpose.msra.mxu0 0.0
    %168 = vmatpush.xpose.msra.mxu0 0.0
    %169 = vmatpush.xpose.msra.mxu0 0.0
    %170 = vmatpush.xpose.msra.mxu0 0.0
    %171 = vmatpush.xpose.msra.mxu0 0.0
    %172 = vmatpush.xpose.msra.mxu0 0.0
    %173 = vmatpush.xpose.msra.mxu0 0.0
    %174 = vmatpush.xpose.msra.mxu0 0.0
    %175 = vmatpush.xpose.msra.mxu0 0.0
    %176 = vmatpush.xpose.msra.mxu0 0.0
    %177 = vmatpush.xpose.msra.mxu0 0.0
    %178 = vmatpush.xpose.msra.mxu0 0.0
    %179 = vmatpush.xpose.msra.mxu0 0.0
    %180 = vmatpush.xpose.msra.mxu0 %v163
    %181 = vmatmul.f32.gmra.mxu0 %v161
    %v182 = vpop.f32.mrf.mxu0
    %v183 = vadd.f32 0.0, %v182
    %184 = vdwg.mxu0
    %185 = vrot.lane.b32.xlu0 %v138, 96
    %v186 = vpop.permute.xlu0 %185
    %v187 = vsel %vm160, %v125, 0
    %v189 = vsel %vm160, %v186, 0
    %191 = vmatpush.xpose.msra.mxu0 0.0
    %192 = vmatpush.xpose.msra.mxu0 0.0
    %193 = vmatpush.xpose.msra.mxu0 0.0
    %194 = vmatpush.xpose.msra.mxu0 0.0
    %195 = vmatpush.xpose.msra.mxu0 0.0
    %196 = vmatpush.xpose.msra.mxu0 0.0
    %197 = vmatpush.xpose.msra.mxu0 0.0
    %198 = vmatpush.xpose.msra.mxu0 0.0
    %199 = vmatpush.xpose.msra.mxu0 0.0
    %200 = vmatpush.xpose.msra.mxu0 0.0
    %201 = vmatpush.xpose.msra.mxu0 0.0
    %202 = vmatpush.xpose.msra.mxu0 0.0
    %203 = vmatpush.xpose.msra.mxu0 0.0
    %204 = vmatpush.xpose.msra.mxu0 0.0
    %205 = vmatpush.xpose.msra.mxu0 0.0
    %206 = vmatpush.xpose.msra.mxu0 %v189
    %207 = vmatmul.f32.gmra.mxu0 %v187
    %v208 = vpop.f32.mrf.mxu0
    %v209 = vadd.f32 0.0, %v208
    %210 = vdwg.mxu0
    %211 = vrot.lane.b32.xlu0 %v142, 96
    %v212 = vpop.permute.xlu0 %211
    %v213 = vsel %vm160, %v129, 0
    %v215 = vsel %vm160, %v212, 0
    %217 = vmatpush.xpose.msra.mxu0 0.0
    %218 = vmatpush.xpose.msra.mxu0 0.0
    %219 = vmatpush.xpose.msra.mxu0 0.0
    %220 = vmatpush.xpose.msra.mxu0 0.0
    %221 = vmatpush.xpose.msra.mxu0 0.0
    %222 = vmatpush.xpose.msra.mxu0 0.0
    %223 = vmatpush.xpose.msra.mxu0 0.0
    %224 = vmatpush.xpose.msra.mxu0 0.0
    %225 = vmatpush.xpose.msra.mxu0 0.0
    %226 = vmatpush.xpose.msra.mxu0 0.0
    %227 = vmatpush.xpose.msra.mxu0 0.0
    %228 = vmatpush.xpose.msra.mxu0 0.0
    %229 = vmatpush.xpose.msra.mxu0 0.0
    %230 = vmatpush.xpose.msra.mxu0 0.0
    %231 = vmatpush.xpose.msra.mxu0 0.0
    %232 = vmatpush.xpose.msra.mxu0 %v215
    %233 = vmatmul.f32.gmra.mxu0 %v213
    %v234 = vpop.f32.mrf.mxu0
    %v235 = vadd.f32 0.0, %v234
    %236 = vdwg.mxu0
    %237 = vrot.lane.b32.xlu0 %v144, 96
    %v238 = vpop.permute.xlu0 %237
    %v239 = vsel %vm160, %v131, 0
    %v241 = vsel %vm160, %v238, 0
    %243 = vmatpush.xpose.msra.mxu0 0.0
    %244 = vmatpush.xpose.msra.mxu0 0.0
    %245 = vmatpush.xpose.msra.mxu0 0.0
    %246 = vmatpush.xpose.msra.mxu0 0.0
    %247 = vmatpush.xpose.msra.mxu0 0.0
    %248 = vmatpush.xpose.msra.mxu0 0.0
    %249 = vmatpush.xpose.msra.mxu0 0.0
    %250 = vmatpush.xpose.msra.mxu0 0.0
    %251 = vmatpush.xpose.msra.mxu0 0.0
    %252 = vmatpush.xpose.msra.mxu0 0.0
    %253 = vmatpush.xpose.msra.mxu0 0.0
    %254 = vmatpush.xpose.msra.mxu0 0.0
    %255 = vmatpush.xpose.msra.mxu0 0.0
    %256 = vmatpush.xpose.msra.mxu0 0.0
    %257 = vmatpush.xpose.msra.mxu0 0.0
    %258 = vmatpush.xpose.msra.mxu0 %v241
    %259 = vmatmul.f32.gmra.mxu0 %v239
    %v260 = vpop.f32.mrf.mxu0
    %v261 = vadd.f32 0.0, %v260
    %262 = vdwg.mxu0
    %v263 = vmul.f32 %v183, 0.25
    %v264 = vmul.f32 %v209, 0.25
    %v265 = vmul.f32 %v235, 0.25
    %v266 = vmul.f32 %v261, 0.25
    %v267 = vadd.f32 %v263, %v81
    %v268 = vadd.f32 %v264, %v82
    %v269 = vadd.f32 %v265, %v83
    %v270 = vadd.f32 %v266, %v84
    %vm271 = vcmask 64512
    %v272 = vsel %vm271, %v267, -inf
    %273 = vmax.xlane.f32.xlu0 %v272
    %v274 = vpop.xlane.xlu0 %273
    %v275 = vsel %vm271, %v268, -inf
    %276 = vmax.xlane.f32.xlu0 %v275
    %v277 = vpop.xlane.xlu0 %276
    %v278 = vsel %vm271, %v269, -inf
    %279 = vmax.xlane.f32.xlu0 %v278
    %v280 = vpop.xlane.xlu0 %279
    %v281 = vsel %vm271, %v270, -inf
    %282 = vmax.xlane.f32.xlu0 %v281
    %v283 = vpop.xlane.xlu0 %282
    %v284 = vsub.f32 %v267, %v274
    %v285 = vsub.f32 %v268, %v277
    %v286 = vsub.f32 %v269, %v280
    %v287 = vsub.f32 %v270, %v283
    %v288 = vmul.f32 %v284, 1.442695
    %v289 = vpow.pop %v288
    %v290 = vmul.f32 %v285, 1.442695
    %v291 = vpow.pop %v290
    %v292 = vmul.f32 %v286, 1.442695
    %v293 = vpow.pop %v292
    %v294 = vmul.f32 %v287, 1.442695
    %v295 = vpow.pop %v294
    %v296 = vsel %vm271, %v289, 0.0
    %297 = vadd.xlane.f32.xlu0 %v296
    %v298 = vpop.xlane.xlu0 %297
    %v299 = vsel %vm271, %v291, 0.0
    %300 = vadd.xlane.f32.xlu0 %v299
    %v301 = vpop.xlane.xlu0 %300
    %v302 = vsel %vm271, %v293, 0.0
    %303 = vadd.xlane.f32.xlu0 %v302
    %v304 = vpop.xlane.xlu0 %303
    %v305 = vsel %vm271, %v295, 0.0
    %306 = vadd.xlane.f32.xlu0 %v305
    %v307 = vpop.xlane.xlu0 %306
    %v308 = vrcp.pop %v298
    %v309 = vrcp.pop %v301
    %v310 = vrcp.pop %v304
    %v311 = vrcp.pop %v307
    %v312 = vmul.f32 %v289, %v308
    %v313 = vmul.f32 %v291, %v309
    %v314 = vmul.f32 %v293, %v310
    %v315 = vmul.f32 %v295, %v311
    %316 = vrot.lane.b32.xlu0 %v150, 64
    %v317 = vpop.permute.xlu0 %316
    %v320 = vsel %vm271, %v312, 0
    %322 = vmatpush.msra.mxu0 0.0
    %323 = vmatpush.msra.mxu0 0.0
    %324 = vmatpush.msra.mxu0 0.0
    %325 = vmatpush.msra.mxu0 0.0
    %326 = vmatpush.msra.mxu0 0.0
    %327 = vmatpush.msra.mxu0 0.0
    %328 = vmatpush.msra.mxu0 0.0
    %329 = vmatpush.msra.mxu0 0.0
    %330 = vmatpush.msra.mxu0 0.0
    %331 = vmatpush.msra.mxu0 0.0
    %332 = vmatpush.msra.mxu0 0.0
    %333 = vmatpush.msra.mxu0 0.0
    %334 = vmatpush.msra.mxu0 0.0
    %335 = vmatpush.msra.mxu0 0.0
    %336 = vmatpush.msra.mxu0 0.0
    %337 = vmatpush.msra.mxu0 %v317
    %338 = vmatmul.f32.gmra.mxu0 %v320
    %v339 = vpop.f32.mrf.mxu0
    %v340 = vadd.f32 0.0, %v339
    %341 = vdwg.mxu0
    %342 = vrot.lane.b32.xlu0 %v151, 64
    %v343 = vpop.permute.xlu0 %342
    %v346 = vsel %vm271, %v313, 0
    %348 = vmatpush.msra.mxu0 0.0
    %349 = vmatpush.msra.mxu0 0.0
    %350 = vmatpush.msra.mxu0 0.0
    %351 = vmatpush.msra.mxu0 0.0
    %352 = vmatpush.msra.mxu0 0.0
    %353 = vmatpush.msra.mxu0 0.0
    %354 = vmatpush.msra.mxu0 0.0
    %355 = vmatpush.msra.mxu0 0.0
    %356 = vmatpush.msra.mxu0 0.0
    %357 = vmatpush.msra.mxu0 0.0
    %358 = vmatpush.msra.mxu0 0.0
    %359 = vmatpush.msra.mxu0 0.0
    %360 = vmatpush.msra.mxu0 0.0
    %361 = vmatpush.msra.mxu0 0.0
    %362 = vmatpush.msra.mxu0 0.0
    %363 = vmatpush.msra.mxu0 %v343
    %364 = vmatmul.f32.gmra.mxu0 %v346
    %v365 = vpop.f32.mrf.mxu0
    %v366 = vadd.f32 0.0, %v365
    %367 = vdwg.mxu0
    %368 = vrot.lane.b32.xlu0 %v155, 64
    %v369 = vpop.permute.xlu0 %368
    %v372 = vsel %vm271, %v314, 0
    %374 = vmatpush.msra.mxu0 0.0
    %375 = vmatpush.msra.mxu0 0.0
    %376 = vmatpush.msra.mxu0 0.0
    %377 = vmatpush.msra.mxu0 0.0
    %378 = vmatpush.msra.mxu0 0.0
    %379 = vmatpush.msra.mxu0 0.0
    %380 = vmatpush.msra.mxu0 0.0
    %381 = vmatpush.msra.mxu0 0.0
    %382 = vmatpush.msra.mxu0 0.0
    %383 = vmatpush.msra.mxu0 0.0
    %384 = vmatpush.msra.mxu0 0.0
    %385 = vmatpush.msra.mxu0 0.0
    %386 = vmatpush.msra.mxu0 0.0
    %387 = vmatpush.msra.mxu0 0.0
    %388 = vmatpush.msra.mxu0 0.0
    %389 = vmatpush.msra.mxu0 %v369
    %390 = vmatmul.f32.gmra.mxu0 %v372
    %v391 = vpop.f32.mrf.mxu0
    %v392 = vadd.f32 0.0, %v391
    %393 = vdwg.mxu0
    %394 = vrot.lane.b32.xlu0 %v157, 64
    %v395 = vpop.permute.xlu0 %394
    %v398 = vsel %vm271, %v315, 0
    %400 = vmatpush.msra.mxu0 0.0
    %401 = vmatpush.msra.mxu0 0.0
    %402 = vmatpush.msra.mxu0 0.0
    %403 = vmatpush.msra.mxu0 0.0
    %404 = vmatpush.msra.mxu0 0.0
    %405 = vmatpush.msra.mxu0 0.0
    %406 = vmatpush.msra.mxu0 0.0
    %407 = vmatpush.msra.mxu0 0.0
    %408 = vmatpush.msra.mxu0 0.0
    %409 = vmatpush.msra.mxu0 0.0
    %410 = vmatpush.msra.mxu0 0.0
    %411 = vmatpush.msra.mxu0 0.0
    %412 = vmatpush.msra.mxu0 0.0
    %413 = vmatpush.msra.mxu0 0.0
    %414 = vmatpush.msra.mxu0 0.0
    %415 = vmatpush.msra.mxu0 %v395
    %416 = vmatmul.f32.gmra.mxu0 %v398
    %v417 = vpop.f32.mrf.mxu0
    %v418 = vadd.f32 0.0, %v417
    %419 = vdwg.mxu0
    %422 = vrot.lane.b32.xlu0 %v392, 16
    %v423 = vpop.permute.xlu0 %422
    %424 = vrot.lane.b32.xlu0 %v418, 16
    %v425 = vpop.permute.xlu0 %424
    %v428 = vsel %vm160, %v340, %v423
    %v429 = vsel %vm160, %v366, %v425
    %v430 = vld [vmem:[%s3] sm:$0xff]
    %v431 = vld [vmem:[%s3 + $0x8] sm:$0xff]
    %v432 = vld [vmem:[%s3 + $0x10] sm:$0xff]
    %v433 = vld [vmem:[%s3 + $0x18] sm:$0xff]
    %v434 = vperm.slane %v87, 3
    %v436 = vsel %vm93, %v428, 0
    %v439 = vsel %vm93, %v429, 0
    %441 = vmatpush.msra.mxu0 0.0
    %442 = vmatpush.msra.mxu0 0.0
    %443 = vmatpush.msra.mxu0 0.0
    %444 = vmatpush.msra.mxu0 0.0
    %445 = vmatpush.msra.mxu0 0.0
    %446 = vmatpush.msra.mxu0 0.0
    %447 = vmatpush.msra.mxu0 0.0
    %448 = vmatpush.msra.mxu0 0.0
    %449 = vmatpush.msra.mxu0 0.0
    %450 = vmatpush.msra.mxu0 0.0
    %451 = vmatpush.msra.mxu0 0.0
    %452 = vmatpush.msra.mxu0 0.0
    %453 = vmatpush.msra.mxu0 %v433
    %454 = vmatpush.msra.mxu0 %v432
    %455 = vmatpush.msra.mxu0 %v431
    %456 = vmatpush.msra.mxu0 %v430
    %457 = vmatmul.f32.gmra.mxu0 %v436
    %v458 = vpop.f32.mrf.mxu0
    %v459 = vadd.f32 %v434, %v458
    %460 = vmatmul.f32.gmra.mxu0 %v439
    %v461 = vpop.f32.mrf.mxu0
    %v462 = vadd.f32 %v434, %v461
    %463 = vdwg.mxu0
    %v464 = vadd.f32 %v85, %v459
    %v465 = vadd.f32 %v86, %v462
    %v466 = vsel %vm93, %v464, 0.0
    %467 = vadd.xlane.f32.xlu0 %v466
    %v468 = vpop.xlane.xlu0 %467
    %v469 = vsel %vm93, %v465, 0.0
    %470 = vadd.xlane.f32.xlu0 %v469
    %v471 = vpop.xlane.xlu0 %470
    %v472 = vrcp.pop 32.0
    %v473 = vmul.f32 32.0, %v472
    %v474 = vsub.f32 1.0, %v473
    %v475 = vmul.f32 %v472, %v474
    %v476 = vadd.f32 %v472, %v475
    %vm477 = vweird.f32 %v472
    %v478 = vsel %vm477, %v472, %v476
    %v479 = vmul.f32 %v468, %v478
    %v480 = vmul.f32 %v471, %v478
    %v481 = vsub.f32 %v464, %v479
    %v482 = vsub.f32 %v465, %v480
    %v483 = vmul.f32 %v481, %v481
    %v484 = vmul.f32 %v482, %v482
    %v485 = vsel %vm93, %v483, 0.0
    %486 = vadd.xlane.f32.xlu0 %v485
    %v487 = vpop.xlane.xlu0 %486
    %v488 = vsel %vm93, %v484, 0.0
    %489 = vadd.xlane.f32.xlu0 %v488
    %v490 = vpop.xlane.xlu0 %489
    %v491 = vmul.f32 %v487, %v478
    %v492 = vmul.f32 %v490, %v478
    %v493 = vadd.f32 %v491, 1e-12
    %v494 = vadd.f32 %v492, 1e-12
    %v495 = vrsqrt.pop %v493
    %v496 = vmul.f32 %v495, %v493
    %v497 = vmul.f32 %v496, %v495
    %v498 = vmul.f32 0.5, %v497
    %v499 = vsub.f32 1.5, %v498
    %v500 = vmul.f32 %v495, %v499
    %vm501 = vweird.f32 %v493
    %vm502 = vweird.f32 %v495
    %vm503 = vmor %vm501, %vm502
    %v504 = vsel %vm503, %v495, %v500
    %v505 = vrsqrt.pop %v494
    %v506 = vmul.f32 %v505, %v494
    %v507 = vmul.f32 %v506, %v505
    %v508 = vmul.f32 0.5, %v507
    %v509 = vsub.f32 1.5, %v508
    %v510 = vmul.f32 %v505, %v509
    %vm511 = vweird.f32 %v494
    %vm512 = vweird.f32 %v505
    %vm513 = vmor %vm511, %vm512
    %v514 = vsel %vm513, %v505, %v510
    %v515 = vmul.f32 %v481, %v504
    %v516 = vmul.f32 %v482, %v514
    %v517 = vperm.slane %v87, 4
    %v518 = vmul.f32 %v515, %v517
    %v519 = vmul.f32 %v516, %v517
    %v520 = vperm.slane %v87, 5
    %v521 = vadd.f32 %v518, %v520
    %v522 = vadd.f32 %v519, %v520
    %v523 = vld [vmem:[%s4] sm:$0xff]
    %v524 = vld [vmem:[%s4 + $0x8] sm:$0xff]
    %v525 = vld [vmem:[%s4 + $0x10] sm:$0xff]
    %v526 = vld [vmem:[%s4 + $0x18] sm:$0xff]
    %v527 = vperm.slane %v87, 6
    %v529 = vsel %vm93, %v521, 0
    %v532 = vsel %vm93, %v522, 0
    %534 = vmatpush.msra.mxu0 0.0
    %535 = vmatpush.msra.mxu0 0.0
    %536 = vmatpush.msra.mxu0 0.0
    %537 = vmatpush.msra.mxu0 0.0
    %538 = vmatpush.msra.mxu0 0.0
    %539 = vmatpush.msra.mxu0 0.0
    %540 = vmatpush.msra.mxu0 0.0
    %541 = vmatpush.msra.mxu0 0.0
    %542 = vmatpush.msra.mxu0 0.0
    %543 = vmatpush.msra.mxu0 0.0
    %544 = vmatpush.msra.mxu0 0.0
    %545 = vmatpush.msra.mxu0 0.0
    %546 = vmatpush.msra.mxu0 %v526
    %547 = vmatpush.msra.mxu0 %v525
    %548 = vmatpush.msra.mxu0 %v524
    %549 = vmatpush.msra.mxu0 %v523
    %550 = vmatmul.f32.gmra.mxu0 %v529
    %v551 = vpop.f32.mrf.mxu0
    %v552 = vadd.f32 %v527, %v551
    %553 = vmatmul.f32.gmra.mxu0 %v532
    %v554 = vpop.f32.mrf.mxu0
    %v555 = vadd.f32 %v527, %v554
    %556 = vdwg.mxu0
    %v557 = vmul.f32 %v552, 0.5
    %v558 = vmul.f32 %v555, 0.5
    %v559 = vmul.f32 %v552, 0.044715
    %v560 = vmul.f32 %v555, 0.044715
    %v561 = vmul.f32 %v559, %v552
    %v562 = vmul.f32 %v560, %v555
    %v563 = vmul.f32 %v561, %v552
    %v564 = vmul.f32 %v562, %v555
    %v565 = vadd.f32 %v552, %v563
    %v566 = vadd.f32 %v555, %v564
    %v567 = vmul.f32 %v565, 0.7978846
    %v568 = vmul.f32 %v566, 0.7978846
    %v569 = vtanh.pop %v567
    %v570 = vtanh.pop %v568
    %v571 = vadd.f32 %v569, 1.0
    %v572 = vadd.f32 %v570, 1.0
    %v573 = vmul.f32 %v557, %v571
    %v574 = vmul.f32 %v558, %v572
    %v575 = vld [vmem:[%s5] sm:$0xff]
    %v576 = vld [vmem:[%s5 + $0x8] sm:$0xff]
    %v577 = vld [vmem:[%s5 + $0x10] sm:$0xff]
    %v578 = vld [vmem:[%s5 + $0x18] sm:$0xff]
    %v579 = vld [vmem:[%s5 + $0x20] sm:$0xff]
    %v580 = vld [vmem:[%s5 + $0x28] sm:$0xff]
    %v581 = vld [vmem:[%s5 + $0x30] sm:$0xff]
    %v582 = vld [vmem:[%s5 + $0x38] sm:$0xff]
    %v583 = vperm.slane %v87, 7
    %vm584 = vcmask 523264
    %v586 = vsel %vm584, %v573, 0
    %v589 = vsel %vm584, %v574, 0
    %591 = vmatpush.msra.mxu0 0.0
    %592 = vmatpush.msra.mxu0 0.0
    %593 = vmatpush.msra.mxu0 0.0
    %594 = vmatpush.msra.mxu0 0.0
    %595 = vmatpush.msra.mxu0 0.0
    %596 = vmatpush.msra.mxu0 0.0
    %597 = vmatpush.msra.mxu0 0.0
    %598 = vmatpush.msra.mxu0 0.0
    %599 = vmatpush.msra.mxu0 %v582
    %600 = vmatpush.msra.mxu0 %v581
    %601 = vmatpush.msra.mxu0 %v580
    %602 = vmatpush.msra.mxu0 %v579
    %603 = vmatpush.msra.mxu0 %v578
    %604 = vmatpush.msra.mxu0 %v577
    %605 = vmatpush.msra.mxu0 %v576
    %606 = vmatpush.msra.mxu0 %v575
    %607 = vmatmul.f32.gmra.mxu0 %v586
    %v608 = vpop.f32.mrf.mxu0
    %v609 = vadd.f32 %v583, %v608
    %610 = vmatmul.f32.gmra.mxu0 %v589
    %v611 = vpop.f32.mrf.mxu0
    %v612 = vadd.f32 %v583, %v611
    %613 = vdwg.mxu0
    %v614 = vadd.f32 %v521, %v609
    %v615 = vadd.f32 %v522, %v612
    %v616 = vsel %vm93, %v614, 0.0
    %617 = vadd.xlane.f32.xlu0 %v616
    %v618 = vpop.xlane.xlu0 %617
    %v619 = vsel %vm93, %v615, 0.0
    %620 = vadd.xlane.f32.xlu0 %v619
    %v621 = vpop.xlane.xlu0 %620
    %v622 = vmul.f32 %v618, %v478
    %v623 = vmul.f32 %v621, %v478
    %v624 = vsub.f32 %v614, %v622
    %v625 = vsub.f32 %v615, %v623
    %v626 = vmul.f32 %v624, %v624
    %v627 = vmul.f32 %v625, %v625
    %v628 = vsel %vm93, %v626, 0.0
    %629 = vadd.xlane.f32.xlu0 %v628
    %v630 = vpop.xlane.xlu0 %629
    %v631 = vsel %vm93, %v627, 0.0
    %632 = vadd.xlane.f32.xlu0 %v631
    %v633 = vpop.xlane.xlu0 %632
    %v634 = vmul.f32 %v630, %v478
    %v635 = vmul.f32 %v633, %v478
    %v636 = vadd.f32 %v634, 1e-12
    %v637 = vadd.f32 %v635, 1e-12
    %v638 = vrsqrt.pop %v636
    %v639 = vmul.f32 %v638, %v636
    %v640 = vmul.f32 %v639, %v638
    %v641 = vmul.f32 0.5, %v640
    %v642 = vsub.f32 1.5, %v641
    %v643 = vmul.f32 %v638, %v642
    %vm644 = vweird.f32 %v636
    %vm645 = vweird.f32 %v638
    %vm646 = vmor %vm644, %vm645
    %v647 = vsel %vm646, %v638, %v643
    %v648 = vrsqrt.pop %v637
    %v649 = vmul.f32 %v648, %v637
    %v650 = vmul.f32 %v649, %v648
    %v651 = vmul.f32 0.5, %v650
    %v652 = vsub.f32 1.5, %v651
    %v653 = vmul.f32 %v648, %v652
    %vm654 = vweird.f32 %v637
    %vm655 = vweird.f32 %v648
    %vm656 = vmor %vm654, %vm655
    %v657 = vsel %vm656, %v648, %v653
    %v658 = vmul.f32 %v624, %v647
    %v659 = vmul.f32 %v625, %v657
    %v660 = vperm.slane %v88, 0
    %v661 = vmul.f32 %v658, %v660
    %v662 = vmul.f32 %v659, %v660
    %v663 = vperm.slane %v88, 1
    %v664 = vadd.f32 %v661, %v663
    %v665 = vadd.f32 %v662, %v663
    %s666 = scalar_lea.vmem %s6, 16
    %v667 = vld [vmem:[%s666] sm:$0xff]
    %v668 = vld [vmem:[%s666 + $0x8] sm:$0x3]
    %s669 = scalar_lea.vmem %s2, 32
    %v670 = vld [vmem:[%s669] sm:$0xff]
    %v671 = vld [vmem:[%s669 + $0x8] sm:$0xff]
    %v672 = vld [vmem:[%s669 + $0x10] sm:$0xff]
    %v673 = vld [vmem:[%s669 + $0x18] sm:$0xff]
    %v675 = vsel %vm93, %v664, 0
    %v678 = vsel %vm93, %v665, 0
    %680 = vmatpush.msra.mxu0 0.0
    %681 = vmatpush.msra.mxu0 0.0
    %682 = vmatpush.msra.mxu0 0.0
    %683 = vmatpush.msra.mxu0 0.0
    %684 = vmatpush.msra.mxu0 0.0
    %685 = vmatpush.msra.mxu0 0.0
    %686 = vmatpush.msra.mxu0 0.0
    %687 = vmatpush.msra.mxu0 0.0
    %688 = vmatpush.msra.mxu0 0.0
    %689 = vmatpush.msra.mxu0 0.0
    %690 = vmatpush.msra.mxu0 0.0
    %691 = vmatpush.msra.mxu0 0.0
    %692 = vmatpush.msra.mxu0 %v673
    %693 = vmatpush.msra.mxu0 %v672
    %694 = vmatpush.msra.mxu0 %v671
    %695 = vmatpush.msra.mxu0 %v670
    %696 = vmatmul.f32.gmra.mxu0 %v675
    %v697 = vpop.f32.mrf.mxu0
    %v698 = vadd.f32 0.0, %v697
    %699 = vmatmul.f32.gmra.mxu0 %v678
    %v700 = vpop.f32.mrf.mxu0
    %v701 = vadd.f32 0.0, %v700
    %702 = vdwg.mxu0
    %v703 = vperm.slane %v667, 0
    %v704 = vadd.f32 %v698, %v703
    %v705 = vadd.f32 %v701, %v703
    %708 = vrot.lane.b32.xlu0 %v704, 112
    %v709 = vpop.permute.xlu0 %708
    %710 = vrot.lane.b32.xlu0 %v705, 112
    %v711 = vpop.permute.xlu0 %710
    %v712 = vperm.slane %v667, 1
    %714 = vrot.lane.b32.xlu0 %v712, 32
    %v715 = vpop.permute.xlu0 %714
    %v717 = vadd.f32 %v698, %v715
    %v718 = vadd.f32 %v701, %v715
    %721 = vrot.lane.b32.xlu0 %v717, 112
    %v722 = vpop.permute.xlu0 %721
    %723 = vrot.lane.b32.xlu0 %v718, 112
    %v724 = vpop.permute.xlu0 %723
    %v725 = vperm.slane %v667, 2
    %727 = vrot.lane.b32.xlu0 %v725, 64
    %v728 = vpop.permute.xlu0 %727
    %v730 = vadd.f32 %v698, %v728
    %v731 = vadd.f32 %v701, %v728
    %734 = vrot.lane.b32.xlu0 %v730, 112
    %v735 = vpop.permute.xlu0 %734
    %736 = vrot.lane.b32.xlu0 %v731, 112
    %v737 = vpop.permute.xlu0 %736
    %738 = vrot.lane.b32.xlu0 %v717, 96
    %v739 = vpop.permute.xlu0 %738
    %v740 = vsel %vm160, %v704, 0
    %v742 = vsel %vm160, %v739, 0
    %744 = vmatpush.xpose.msra.mxu0 0.0
    %745 = vmatpush.xpose.msra.mxu0 0.0
    %746 = vmatpush.xpose.msra.mxu0 0.0
    %747 = vmatpush.xpose.msra.mxu0 0.0
    %748 = vmatpush.xpose.msra.mxu0 0.0
    %749 = vmatpush.xpose.msra.mxu0 0.0
    %750 = vmatpush.xpose.msra.mxu0 0.0
    %751 = vmatpush.xpose.msra.mxu0 0.0
    %752 = vmatpush.xpose.msra.mxu0 0.0
    %753 = vmatpush.xpose.msra.mxu0 0.0
    %754 = vmatpush.xpose.msra.mxu0 0.0
    %755 = vmatpush.xpose.msra.mxu0 0.0
    %756 = vmatpush.xpose.msra.mxu0 0.0
    %757 = vmatpush.xpose.msra.mxu0 0.0
    %758 = vmatpush.xpose.msra.mxu0 0.0
    %759 = vmatpush.xpose.msra.mxu0 %v742
    %760 = vmatmul.f32.gmra.mxu0 %v740
    %v761 = vpop.f32.mrf.mxu0
    %v762 = vadd.f32 0.0, %v761
    %763 = vdwg.mxu0
    %764 = vrot.lane.b32.xlu0 %v718, 96
    %v765 = vpop.permute.xlu0 %764
    %v766 = vsel %vm160, %v705, 0
    %v768 = vsel %vm160, %v765, 0
    %770 = vmatpush.xpose.msra.mxu0 0.0
    %771 = vmatpush.xpose.msra.mxu0 0.0
    %772 = vmatpush.xpose.msra.mxu0 0.0
    %773 = vmatpush.xpose.msra.mxu0 0.0
    %774 = vmatpush.xpose.msra.mxu0 0.0
    %775 = vmatpush.xpose.msra.mxu0 0.0
    %776 = vmatpush.xpose.msra.mxu0 0.0
    %777 = vmatpush.xpose.msra.mxu0 0.0
    %778 = vmatpush.xpose.msra.mxu0 0.0
    %779 = vmatpush.xpose.msra.mxu0 0.0
    %780 = vmatpush.xpose.msra.mxu0 0.0
    %781 = vmatpush.xpose.msra.mxu0 0.0
    %782 = vmatpush.xpose.msra.mxu0 0.0
    %783 = vmatpush.xpose.msra.mxu0 0.0
    %784 = vmatpush.xpose.msra.mxu0 0.0
    %785 = vmatpush.xpose.msra.mxu0 %v768
    %786 = vmatmul.f32.gmra.mxu0 %v766
    %v787 = vpop.f32.mrf.mxu0
    %v788 = vadd.f32 0.0, %v787
    %789 = vdwg.mxu0
    %790 = vrot.lane.b32.xlu0 %v722, 96
    %v791 = vpop.permute.xlu0 %790
    %v792 = vsel %vm160, %v709, 0
    %v794 = vsel %vm160, %v791, 0
    %796 = vmatpush.xpose.msra.mxu0 0.0
    %797 = vmatpush.xpose.msra.mxu0 0.0
    %798 = vmatpush.xpose.msra.mxu0 0.0
    %799 = vmatpush.xpose.msra.mxu0 0.0
    %800 = vmatpush.xpose.msra.mxu0 0.0
    %801 = vmatpush.xpose.msra.mxu0 0.0
    %802 = vmatpush.xpose.msra.mxu0 0.0
    %803 = vmatpush.xpose.msra.mxu0 0.0
    %804 = vmatpush.xpose.msra.mxu0 0.0
    %805 = vmatpush.xpose.msra.mxu0 0.0
    %806 = vmatpush.xpose.msra.mxu0 0.0
    %807 = vmatpush.xpose.msra.mxu0 0.0
    %808 = vmatpush.xpose.msra.mxu0 0.0
    %809 = vmatpush.xpose.msra.mxu0 0.0
    %810 = vmatpush.xpose.msra.mxu0 0.0
    %811 = vmatpush.xpose.msra.mxu0 %v794
    %812 = vmatmul.f32.gmra.mxu0 %v792
    %v813 = vpop.f32.mrf.mxu0
    %v814 = vadd.f32 0.0, %v813
    %815 = vdwg.mxu0
    %816 = vrot.lane.b32.xlu0 %v724, 96
    %v817 = vpop.permute.xlu0 %816
    %v818 = vsel %vm160, %v711, 0
    %v820 = vsel %vm160, %v817, 0
    %822 = vmatpush.xpose.msra.mxu0 0.0
    %823 = vmatpush.xpose.msra.mxu0 0.0
    %824 = vmatpush.xpose.msra.mxu0 0.0
    %825 = vmatpush.xpose.msra.mxu0 0.0
    %826 = vmatpush.xpose.msra.mxu0 0.0
    %827 = vmatpush.xpose.msra.mxu0 0.0
    %828 = vmatpush.xpose.msra.mxu0 0.0
    %829 = vmatpush.xpose.msra.mxu0 0.0
    %830 = vmatpush.xpose.msra.mxu0 0.0
    %831 = vmatpush.xpose.msra.mxu0 0.0
    %832 = vmatpush.xpose.msra.mxu0 0.0
    %833 = vmatpush.xpose.msra.mxu0 0.0
    %834 = vmatpush.xpose.msra.mxu0 0.0
    %835 = vmatpush.xpose.msra.mxu0 0.0
    %836 = vmatpush.xpose.msra.mxu0 0.0
    %837 = vmatpush.xpose.msra.mxu0 %v820
    %838 = vmatmul.f32.gmra.mxu0 %v818
    %v839 = vpop.f32.mrf.mxu0
    %v840 = vadd.f32 0.0, %v839
    %841 = vdwg.mxu0
    %v842 = vmul.f32 %v762, 0.25
    %v843 = vmul.f32 %v788, 0.25
    %v844 = vmul.f32 %v814, 0.25
    %v845 = vmul.f32 %v840, 0.25
    %v846 = vadd.f32 %v842, %v81
    %v847 = vadd.f32 %v843, %v82
    %v848 = vadd.f32 %v844, %v83
    %v849 = vadd.f32 %v845, %v84
    %v850 = vsel %vm271, %v846, -inf
    %851 = vmax.xlane.f32.xlu0 %v850
    %v852 = vpop.xlane.xlu0 %851
    %v853 = vsel %vm271, %v847, -inf
    %854 = vmax.xlane.f32.xlu0 %v853
    %v855 = vpop.xlane.xlu0 %854
    %v856 = vsel %vm271, %v848, -inf
    %857 = vmax.xlane.f32.xlu0 %v856
    %v858 = vpop.xlane.xlu0 %857
    %v859 = vsel %vm271, %v849, -inf
    %860 = vmax.xlane.f32.xlu0 %v859
    %v861 = vpop.xlane.xlu0 %860
    %v862 = vsub.f32 %v846, %v852
    %v863 = vsub.f32 %v847, %v855
    %v864 = vsub.f32 %v848, %v858
    %v865 = vsub.f32 %v849, %v861
    %v866 = vmul.f32 %v862, 1.442695
    %v867 = vpow.pop %v866
    %v868 = vmul.f32 %v863, 1.442695
    %v869 = vpow.pop %v868
    %v870 = vmul.f32 %v864, 1.442695
    %v871 = vpow.pop %v870
    %v872 = vmul.f32 %v865, 1.442695
    %v873 = vpow.pop %v872
    %v874 = vsel %vm271, %v867, 0.0
    %875 = vadd.xlane.f32.xlu0 %v874
    %v876 = vpop.xlane.xlu0 %875
    %v877 = vsel %vm271, %v869, 0.0
    %878 = vadd.xlane.f32.xlu0 %v877
    %v879 = vpop.xlane.xlu0 %878
    %v880 = vsel %vm271, %v871, 0.0
    %881 = vadd.xlane.f32.xlu0 %v880
    %v882 = vpop.xlane.xlu0 %881
    %v883 = vsel %vm271, %v873, 0.0
    %884 = vadd.xlane.f32.xlu0 %v883
    %v885 = vpop.xlane.xlu0 %884
    %v886 = vrcp.pop %v876
    %v887 = vrcp.pop %v879
    %v888 = vrcp.pop %v882
    %v889 = vrcp.pop %v885
    %v890 = vmul.f32 %v867, %v886
    %v891 = vmul.f32 %v869, %v887
    %v892 = vmul.f32 %v871, %v888
    %v893 = vmul.f32 %v873, %v889
    %894 = vrot.lane.b32.xlu0 %v730, 64
    %v895 = vpop.permute.xlu0 %894
    %v898 = vsel %vm271, %v890, 0
    %900 = vmatpush.msra.mxu0 0.0
    %901 = vmatpush.msra.mxu0 0.0
    %902 = vmatpush.msra.mxu0 0.0
    %903 = vmatpush.msra.mxu0 0.0
    %904 = vmatpush.msra.mxu0 0.0
    %905 = vmatpush.msra.mxu0 0.0
    %906 = vmatpush.msra.mxu0 0.0
    %907 = vmatpush.msra.mxu0 0.0
    %908 = vmatpush.msra.mxu0 0.0
    %909 = vmatpush.msra.mxu0 0.0
    %910 = vmatpush.msra.mxu0 0.0
    %911 = vmatpush.msra.mxu0 0.0
    %912 = vmatpush.msra.mxu0 0.0
    %913 = vmatpush.msra.mxu0 0.0
    %914 = vmatpush.msra.mxu0 0.0
    %915 = vmatpush.msra.mxu0 %v895
    %916 = vmatmul.f32.gmra.mxu0 %v898
    %v917 = vpop.f32.mrf.mxu0
    %v918 = vadd.f32 0.0, %v917
    %919 = vdwg.mxu0
    %920 = vrot.lane.b32.xlu0 %v731, 64
    %v921 = vpop.permute.xlu0 %920
    %v924 = vsel %vm271, %v891, 0
    %926 = vmatpush.msra.mxu0 0.0
    %927 = vmatpush.msra.mxu0 0.0
    %928 = vmatpush.msra.mxu0 0.0
    %929 = vmatpush.msra.mxu0 0.0
    %930 = vmatpush.msra.mxu0 0.0
    %931 = vmatpush.msra.mxu0 0.0
    %932 = vmatpush.msra.mxu0 0.0
    %933 = vmatpush.msra.mxu0 0.0
    %934 = vmatpush.msra.mxu0 0.0
    %935 = vmatpush.msra.mxu0 0.0
    %936 = vmatpush.msra.mxu0 0.0
    %937 = vmatpush.msra.mxu0 0.0
    %938 = vmatpush.msra.mxu0 0.0
    %939 = vmatpush.msra.mxu0 0.0
    %940 = vmatpush.msra.mxu0 0.0
    %941 = vmatpush.msra.mxu0 %v921
    %942 = vmatmul.f32.gmra.mxu0 %v924
    %v943 = vpop.f32.mrf.mxu0
    %v944 = vadd.f32 0.0, %v943
    %945 = vdwg.mxu0
    %946 = vrot.lane.b32.xlu0 %v735, 64
    %v947 = vpop.permute.xlu0 %946
    %v950 = vsel %vm271, %v892, 0
    %952 = vmatpush.msra.mxu0 0.0
    %953 = vmatpush.msra.mxu0 0.0
    %954 = vmatpush.msra.mxu0 0.0
    %955 = vmatpush.msra.mxu0 0.0
    %956 = vmatpush.msra.mxu0 0.0
    %957 = vmatpush.msra.mxu0 0.0
    %958 = vmatpush.msra.mxu0 0.0
    %959 = vmatpush.msra.mxu0 0.0
    %960 = vmatpush.msra.mxu0 0.0
    %961 = vmatpush.msra.mxu0 0.0
    %962 = vmatpush.msra.mxu0 0.0
    %963 = vmatpush.msra.mxu0 0.0
    %964 = vmatpush.msra.mxu0 0.0
    %965 = vmatpush.msra.mxu0 0.0
    %966 = vmatpush.msra.mxu0 0.0
    %967 = vmatpush.msra.mxu0 %v947
    %968 = vmatmul.f32.gmra.mxu0 %v950
    %v969 = vpop.f32.mrf.mxu0
    %v970 = vadd.f32 0.0, %v969
    %971 = vdwg.mxu0
    %972 = vrot.lane.b32.xlu0 %v737, 64
    %v973 = vpop.permute.xlu0 %972
    %v976 = vsel %vm271, %v893, 0
    %978 = vmatpush.msra.mxu0 0.0
    %979 = vmatpush.msra.mxu0 0.0
    %980 = vmatpush.msra.mxu0 0.0
    %981 = vmatpush.msra.mxu0 0.0
    %982 = vmatpush.msra.mxu0 0.0
    %983 = vmatpush.msra.mxu0 0.0
    %984 = vmatpush.msra.mxu0 0.0
    %985 = vmatpush.msra.mxu0 0.0
    %986 = vmatpush.msra.mxu0 0.0
    %987 = vmatpush.msra.mxu0 0.0
    %988 = vmatpush.msra.mxu0 0.0
    %989 = vmatpush.msra.mxu0 0.0
    %990 = vmatpush.msra.mxu0 0.0
    %991 = vmatpush.msra.mxu0 0.0
    %992 = vmatpush.msra.mxu0 0.0
    %993 = vmatpush.msra.mxu0 %v973
    %994 = vmatmul.f32.gmra.mxu0 %v976
    %v995 = vpop.f32.mrf.mxu0
    %v996 = vadd.f32 0.0, %v995
    %997 = vdwg.mxu0
    %1000 = vrot.lane.b32.xlu0 %v970, 16
    %v1001 = vpop.permute.xlu0 %1000
    %1002 = vrot.lane.b32.xlu0 %v996, 16
    %v1003 = vpop.permute.xlu0 %1002
    %v1006 = vsel %vm160, %v918, %v1001
    %v1007 = vsel %vm160, %v944, %v1003
    %s1008 = scalar_lea.vmem %s3, 32
    %v1009 = vld [vmem:[%s1008] sm:$0xff]
    %v1010 = vld [vmem:[%s1008 + $0x8] sm:$0xff]
    %v1011 = vld [vmem:[%s1008 + $0x10] sm:$0xff]
    %v1012 = vld [vmem:[%s1008 + $0x18] sm:$0xff]
    %v1013 = vperm.slane %v667, 3
    %v1015 = vsel %vm93, %v1006, 0
    %v1018 = vsel %vm93, %v1007, 0
    %1020 = vmatpush.msra.mxu0 0.0
    %1021 = vmatpush.msra.mxu0 0.0
    %1022 = vmatpush.msra.mxu0 0.0
    %1023 = vmatpush.msra.mxu0 0.0
    %1024 = vmatpush.msra.mxu0 0.0
    %1025 = vmatpush.msra.mxu0 0.0
    %1026 = vmatpush.msra.mxu0 0.0
    %1027 = vmatpush.msra.mxu0 0.0
    %1028 = vmatpush.msra.mxu0 0.0
    %1029 = vmatpush.msra.mxu0 0.0
    %1030 = vmatpush.msra.mxu0 0.0
    %1031 = vmatpush.msra.mxu0 0.0
    %1032 = vmatpush.msra.mxu0 %v1012
    %1033 = vmatpush.msra.mxu0 %v1011
    %1034 = vmatpush.msra.mxu0 %v1010
    %1035 = vmatpush.msra.mxu0 %v1009
    %1036 = vmatmul.f32.gmra.mxu0 %v1015
    %v1037 = vpop.f32.mrf.mxu0
    %v1038 = vadd.f32 %v1013, %v1037
    %1039 = vmatmul.f32.gmra.mxu0 %v1018
    %v1040 = vpop.f32.mrf.mxu0
    %v1041 = vadd.f32 %v1013, %v1040
    %1042 = vdwg.mxu0
    %v1043 = vadd.f32 %v664, %v1038
    %v1044 = vadd.f32 %v665, %v1041
    %v1045 = vsel %vm93, %v1043, 0.0
    %1046 = vadd.xlane.f32.xlu0 %v1045
    %v1047 = vpop.xlane.xlu0 %1046
    %v1048 = vsel %vm93, %v1044, 0.0
    %1049 = vadd.xlane.f32.xlu0 %v1048
    %v1050 = vpop.xlane.xlu0 %1049
    %v1051 = vmul.f32 %v1047, %v478
    %v1052 = vmul.f32 %v1050, %v478
    %v1053 = vsub.f32 %v1043, %v1051
    %v1054 = vsub.f32 %v1044, %v1052
    %v1055 = vmul.f32 %v1053, %v1053
    %v1056 = vmul.f32 %v1054, %v1054
    %v1057 = vsel %vm93, %v1055, 0.0
    %1058 = vadd.xlane.f32.xlu0 %v1057
    %v1059 = vpop.xlane.xlu0 %1058
    %v1060 = vsel %vm93, %v1056, 0.0
    %1061 = vadd.xlane.f32.xlu0 %v1060
    %v1062 = vpop.xlane.xlu0 %1061
    %v1063 = vmul.f32 %v1059, %v478
    %v1064 = vmul.f32 %v1062, %v478
    %v1065 = vadd.f32 %v1063, 1e-12
    %v1066 = vadd.f32 %v1064, 1e-12
    %v1067 = vrsqrt.pop %v1065
    %v1068 = vmul.f32 %v1067, %v1065
    %v1069 = vmul.f32 %v1068, %v1067
    %v1070 = vmul.f32 0.5, %v1069
    %v1071 = vsub.f32 1.5, %v1070
    %v1072 = vmul.f32 %v1067, %v1071
    %vm1073 = vweird.f32 %v1065
    %vm1074 = vweird.f32 %v1067
    %vm1075 = vmor %vm1073, %vm1074
    %v1076 = vsel %vm1075, %v1067, %v1072
    %v1077 = vrsqrt.pop %v1066
    %v1078 = vmul.f32 %v1077, %v1066
    %v1079 = vmul.f32 %v1078, %v1077
    %v1080 = vmul.f32 0.5, %v1079
    %v1081 = vsub.f32 1.5, %v1080
    %v1082 = vmul.f32 %v1077, %v1081
    %vm1083 = vweird.f32 %v1066
    %vm1084 = vweird.f32 %v1077
    %vm1085 = vmor %vm1083, %vm1084
    %v1086 = vsel %vm1085, %v1077, %v1082
    %v1087 = vmul.f32 %v1053, %v1076
    %v1088 = vmul.f32 %v1054, %v1086
    %v1089 = vperm.slane %v667, 4
    %v1090 = vmul.f32 %v1087, %v1089
    %v1091 = vmul.f32 %v1088, %v1089
    %v1092 = vperm.slane %v667, 5
    %v1093 = vadd.f32 %v1090, %v1092
    %v1094 = vadd.f32 %v1091, %v1092
    %s1095 = scalar_lea.vmem %s4, 32
    %v1096 = vld [vmem:[%s1095] sm:$0xff]
    %v1097 = vld [vmem:[%s1095 + $0x8] sm:$0xff]
    %v1098 = vld [vmem:[%s1095 + $0x10] sm:$0xff]
    %v1099 = vld [vmem:[%s1095 + $0x18] sm:$0xff]
    %v1100 = vperm.slane %v667, 6
    %v1102 = vsel %vm93, %v1093, 0
    %v1105 = vsel %vm93, %v1094, 0
    %1107 = vmatpush.msra.mxu0 0.0
    %1108 = vmatpush.msra.mxu0 0.0
    %1109 = vmatpush.msra.mxu0 0.0
    %1110 = vmatpush.msra.mxu0 0.0
    %1111 = vmatpush.msra.mxu0 0.0
    %1112 = vmatpush.msra.mxu0 0.0
    %1113 = vmatpush.msra.mxu0 0.0
    %1114 = vmatpush.msra.mxu0 0.0
    %1115 = vmatpush.msra.mxu0 0.0
    %1116 = vmatpush.msra.mxu0 0.0
    %1117 = vmatpush.msra.mxu0 0.0
    %1118 = vmatpush.msra.mxu0 0.0
    %1119 = vmatpush.msra.mxu0 %v1099
    %1120 = vmatpush.msra.mxu0 %v1098
    %1121 = vmatpush.msra.mxu0 %v1097
    %1122 = vmatpush.msra.mxu0 %v1096
    %1123 = vmatmul.f32.gmra.mxu0 %v1102
    %v1124 = vpop.f32.mrf.mxu0
    %v1125 = vadd.f32 %v1100, %v1124
    %1126 = vmatmul.f32.gmra.mxu0 %v1105
    %v1127 = vpop.f32.mrf.mxu0
    %v1128 = vadd.f32 %v1100, %v1127
    %1129 = vdwg.mxu0
    %v1130 = vmul.f32 %v1125, 0.5
    %v1131 = vmul.f32 %v1128, 0.5
    %v1132 = vmul.f32 %v1125, 0.044715
    %v1133 = vmul.f32 %v1128, 0.044715
    %v1134 = vmul.f32 %v1132, %v1125
    %v1135 = vmul.f32 %v1133, %v1128
    %v1136 = vmul.f32 %v1134, %v1125
    %v1137 = vmul.f32 %v1135, %v1128
    %v1138 = vadd.f32 %v1125, %v1136
    %v1139 = vadd.f32 %v1128, %v1137
    %v1140 = vmul.f32 %v1138, 0.7978846
    %v1141 = vmul.f32 %v1139, 0.7978846
    %v1142 = vtanh.pop %v1140
    %v1143 = vtanh.pop %v1141
    %v1144 = vadd.f32 %v1142, 1.0
    %v1145 = vadd.f32 %v1143, 1.0
    %v1146 = vmul.f32 %v1130, %v1144
    %v1147 = vmul.f32 %v1131, %v1145
    %s1148 = scalar_lea.vmem %s5, 64
    %v1149 = vld [vmem:[%s1148] sm:$0xff]
    %v1150 = vld [vmem:[%s1148 + $0x8] sm:$0xff]
    %v1151 = vld [vmem:[%s1148 + $0x10] sm:$0xff]
    %v1152 = vld [vmem:[%s1148 + $0x18] sm:$0xff]
    %v1153 = vld [vmem:[%s1148 + $0x20] sm:$0xff]
    %v1154 = vld [vmem:[%s1148 + $0x28] sm:$0xff]
    %v1155 = vld [vmem:[%s1148 + $0x30] sm:$0xff]
    %v1156 = vld [vmem:[%s1148 + $0x38] sm:$0xff]
    %v1157 = vperm.slane %v667, 7
    %v1159 = vsel %vm584, %v1146, 0
    %v1162 = vsel %vm584, %v1147, 0
    %1164 = vmatpush.msra.mxu0 0.0
    %1165 = vmatpush.msra.mxu0 0.0
    %1166 = vmatpush.msra.mxu0 0.0
    %1167 = vmatpush.msra.mxu0 0.0
    %1168 = vmatpush.msra.mxu0 0.0
    %1169 = vmatpush.msra.mxu0 0.0
    %1170 = vmatpush.msra.mxu0 0.0
    %1171 = vmatpush.msra.mxu0 0.0
    %1172 = vmatpush.msra.mxu0 %v1156
    %1173 = vmatpush.msra.mxu0 %v1155
    %1174 = vmatpush.msra.mxu0 %v1154
    %1175 = vmatpush.msra.mxu0 %v1153
    %1176 = vmatpush.msra.mxu0 %v1152
    %1177 = vmatpush.msra.mxu0 %v1151
    %1178 = vmatpush.msra.mxu0 %v1150
    %1179 = vmatpush.msra.mxu0 %v1149
    %1180 = vmatmul.f32.gmra.mxu0 %v1159
    %v1181 = vpop.f32.mrf.mxu0
    %v1182 = vadd.f32 %v1157, %v1181
    %1183 = vmatmul.f32.gmra.mxu0 %v1162
    %v1184 = vpop.f32.mrf.mxu0
    %v1185 = vadd.f32 %v1157, %v1184
    %1186 = vdwg.mxu0
    %v1187 = vadd.f32 %v1093, %v1182
    %v1188 = vadd.f32 %v1094, %v1185
    %v1189 = vsel %vm93, %v1187, 0.0
    %1190 = vadd.xlane.f32.xlu0 %v1189
    %v1191 = vpop.xlane.xlu0 %1190
    %v1192 = vsel %vm93, %v1188, 0.0
    %1193 = vadd.xlane.f32.xlu0 %v1192
    %v1194 = vpop.xlane.xlu0 %1193
    %v1195 = vmul.f32 %v1191, %v478
    %v1196 = vmul.f32 %v1194, %v478
    %v1197 = vsub.f32 %v1187, %v1195
    %v1198 = vsub.f32 %v1188, %v1196
    %v1199 = vmul.f32 %v1197, %v1197
    %v1200 = vmul.f32 %v1198, %v1198
    %v1201 = vsel %vm93, %v1199, 0.0
    %1202 = vadd.xlane.f32.xlu0 %v1201
    %v1203 = vpop.xlane.xlu0 %1202
    %v1204 = vsel %vm93, %v1200, 0.0
    %1205 = vadd.xlane.f32.xlu0 %v1204
    %v1206 = vpop.xlane.xlu0 %1205
    %v1207 = vmul.f32 %v1203, %v478
    %v1208 = vmul.f32 %v1206, %v478
    %v1209 = vadd.f32 %v1207, 1e-12
    %v1210 = vadd.f32 %v1208, 1e-12
    %v1211 = vrsqrt.pop %v1209
    %v1212 = vmul.f32 %v1211, %v1209
    %v1213 = vmul.f32 %v1212, %v1211
    %v1214 = vmul.f32 0.5, %v1213
    %v1215 = vsub.f32 1.5, %v1214
    %v1216 = vmul.f32 %v1211, %v1215
    %vm1217 = vweird.f32 %v1209
    %vm1218 = vweird.f32 %v1211
    %vm1219 = vmor %vm1217, %vm1218
    %v1220 = vsel %vm1219, %v1211, %v1216
    %v1221 = vrsqrt.pop %v1210
    %v1222 = vmul.f32 %v1221, %v1210
    %v1223 = vmul.f32 %v1222, %v1221
    %v1224 = vmul.f32 0.5, %v1223
    %v1225 = vsub.f32 1.5, %v1224
    %v1226 = vmul.f32 %v1221, %v1225
    %vm1227 = vweird.f32 %v1210
    %vm1228 = vweird.f32 %v1221
    %vm1229 = vmor %vm1227, %vm1228
    %v1230 = vsel %vm1229, %v1221, %v1226
    %v1231 = vmul.f32 %v1197, %v1220
    %v1232 = vmul.f32 %v1198, %v1230
    %v1233 = vperm.slane %v668, 0
    %v1234 = vmul.f32 %v1231, %v1233
    %v1235 = vmul.f32 %v1232, %v1233
    %v1236 = vperm.slane %v668, 1
    %v1237 = vadd.f32 %v1234, %v1236
    %v1238 = vadd.f32 %v1235, %v1236
    %v1239 = vld [vmem:[#allocation5] sm:$0xff]
    %v1240 = vld [vmem:[#allocation5 + $0x8] sm:$0xff]
    %v1241 = vld [vmem:[#allocation5 + $0x10] sm:$0xff]
    %v1242 = vld [vmem:[#allocation5 + $0x18] sm:$0xff]
    %v1243 = vld [vmem:[#allocation7] sm:$0x1]
    %v1244 = vperm.slane %v1243, 0
    %v1247 = vrot.slane %v1238, 7
    %vm1248 = vcmask 1041409
    %v1249 = vsel %vm1248, %v1247, %v1237
    %v1250 = vsel %vm93, %v1249, 0
    %1252 = vmatpush.msra.mxu0 0.0
    %1253 = vmatpush.msra.mxu0 0.0
    %1254 = vmatpush.msra.mxu0 0.0
    %1255 = vmatpush.msra.mxu0 0.0
    %1256 = vmatpush.msra.mxu0 0.0
    %1257 = vmatpush.msra.mxu0 0.0
    %1258 = vmatpush.msra.mxu0 0.0
    %1259 = vmatpush.msra.mxu0 0.0
    %1260 = vmatpush.msra.mxu0 0.0
    %1261 = vmatpush.msra.mxu0 0.0
    %1262 = vmatpush.msra.mxu0 0.0
    %1263 = vmatpush.msra.mxu0 0.0
    %1264 = vmatpush.msra.mxu0 %v1242
    %1265 = vmatpush.msra.mxu0 %v1241
    %1266 = vmatpush.msra.mxu0 %v1240
    %1267 = vmatpush.msra.mxu0 %v1239
    %1268 = vmatmul.f32.gmra.mxu0 %v1250
    %v1269 = vpop.f32.mrf.mxu0
    %v1270 = vadd.f32 %v1244, %v1269
    %1271 = vdwg.mxu0
    %s1272 = scalar_lea.vmem [#allocation5], 32
    %v1273 = vld [vmem:[%s1272] sm:$0xff]
    %v1274 = vld [vmem:[%s1272 + $0x8] sm:$0xff]
    %v1275 = vld [vmem:[%s1272 + $0x10] sm:$0xff]
    %v1276 = vld [vmem:[%s1272 + $0x18] sm:$0xff]
    %v1277 = vld [vmem:[#allocation7 + $0x1] sm:$0x1]
    %v1278 = vperm.slane %v1277, 0
    %v1279 = vsel %vm93, %v1237, 0
    %v1281 = vsel %vm93, %v1238, 0
    %1283 = vmatpush.msra.mxu0 0.0
    %1284 = vmatpush.msra.mxu0 0.0
    %1285 = vmatpush.msra.mxu0 0.0
    %1286 = vmatpush.msra.mxu0 0.0
    %1287 = vmatpush.msra.mxu0 0.0
    %1288 = vmatpush.msra.mxu0 0.0
    %1289 = vmatpush.msra.mxu0 0.0
    %1290 = vmatpush.msra.mxu0 0.0
    %1291 = vmatpush.msra.mxu0 0.0
    %1292 = vmatpush.msra.mxu0 0.0
    %1293 = vmatpush.msra.mxu0 0.0
    %1294 = vmatpush.msra.mxu0 0.0
    %1295 = vmatpush.msra.mxu0 %v1276
    %1296 = vmatpush.msra.mxu0 %v1275
    %1297 = vmatpush.msra.mxu0 %v1274
    %1298 = vmatpush.msra.mxu0 %v1273
    %1299 = vmatmul.f32.gmra.mxu0 %v1279
    %v1300 = vpop.f32.mrf.mxu0
    %v1301 = vadd.f32 %v1278, %v1300
    %1302 = vmatmul.f32.gmra.mxu0 %v1281
    %v1303 = vpop.f32.mrf.mxu0
    %v1304 = vadd.f32 %v1278, %v1303
    %1305 = vdwg.mxu0
    %v1306 = vld [vmem:[%s9] sm:$0xff]
    %v1307 = vld [vmem:[%s9 + $0x8] sm:$0xff]
    %v1308 = vld [vmem:[%s9 + $0x10] sm:$0x3]
    %vm1309 = vcmask 1041408
    %v1310 = vsel %vm1309, %v1270, -inf
    %1311 = vmax.xlane.f32.xlu0 %v1310
    %v1312 = vpop.xlane.xlu0 %1311
    %v1313 = vsub.f32 %v1270, %v1312
    %v1314 = vmul.f32 %v1313, 1.442695
    %v1315 = vpow.pop %v1314
    %v1316 = vsel %vm1309, %v1315, 0.0
    %1317 = vadd.xlane.f32.xlu0 %v1316
    %v1318 = vpop.xlane.xlu0 %1317
    %v1319 = vlog2.pop %v1318
    %v1320 = vmul.f32 %v1319, 0.6931472
    %v1321 = vsub.f32 %v1313, %v1320
    %v1322 = vmul.f32 %v1306, %v1321
    %v1323 = vsel %vm1309, %v1322, 0.0
    %1324 = vadd.xlane.f32.xlu0 %v1323
    %v1325 = vpop.xlane.xlu0 %1324
    %v1326 = vsub.f32 0.0, %v1325
    %v1327 = vsel %vm1309, %v1326, 0.0
    %v1328 = vrot.slane %v1327, 4
    %v1329 = vadd.f32 %v1327, %v1328
    %v1330 = vrot.slane %v1329, 2
    %v1331 = vadd.f32 %v1329, %v1330
    %v1332 = vrot.slane %v1331, 1
    %v1333 = vadd.f32 %v1331, %v1332
    %v1334 = vrcp.pop 2.0
    %v1335 = vmul.f32 2.0, %v1334
    %v1336 = vsub.f32 1.0, %v1335
    %v1337 = vmul.f32 %v1334, %v1336
    %v1338 = vadd.f32 %v1334, %v1337
    %vm1339 = vweird.f32 %v1334
    %v1340 = vsel %vm1339, %v1334, %v1338
    %v1341 = vmul.f32 %v1333, %v1340
    %1342 = vmax.xlane.f32.xlu0 %v1301
    %v1343 = vpop.xlane.xlu0 %1342
    %1344 = vmax.xlane.f32.xlu0 %v1304
    %v1345 = vpop.xlane.xlu0 %1344
    %v1346 = vsub.f32 %v1301, %v1343
    %v1347 = vsub.f32 %v1304, %v1345
    %v1348 = vmul.f32 %v1346, 1.442695
    %v1349 = vpow.pop %v1348
    %v1350 = vmul.f32 %v1347, 1.442695
    %v1351 = vpow.pop %v1350
    %1352 = vadd.xlane.f32.xlu0 %v1349
    %v1353 = vpop.xlane.xlu0 %1352
    %1354 = vadd.xlane.f32.xlu0 %v1351
    %v1355 = vpop.xlane.xlu0 %1354
    %v1356 = vlog2.pop %v1353
    %v1357 = vmul.f32 %v1356, 0.6931472
    %v1358 = vlog2.pop %v1355
    %v1359 = vmul.f32 %v1358, 0.6931472
    %v1360 = vsub.f32 %v1346, %v1357
    %v1361 = vsub.f32 %v1347, %v1359
    %v1364 = vrot.slane %v1360, 6
    %v1365 = vrot.slane %v1361, 6
    %v1366 = vsel %vm1309, %v1364, %v1365
    %v1370 = vmul.f32 %v1306, %v1364
    %v1371 = vmul.f32 %v1307, %v1366
    %v1372 = vmul.f32 %v1308, %v1365
    %vm1373 = vcmask 1047554
    %v1374 = vsel %vm1373, %v1370, 0.0
    %1375 = vadd.xlane.f32.xlu0 %v1374
    %v1376 = vpop.xlane.xlu0 %1375
    %1377 = vadd.xlane.f32.xlu0 %v1371
    %v1378 = vpop.xlane.xlu0 %1377
    %v1379 = vsel %vm1309, %v1372, 0.0
    %1380 = vadd.xlane.f32.xlu0 %v1379
    %v1381 = vpop.xlane.xlu0 %1380
    %v1382 = vsub.f32 0.0, %v1376
    %v1383 = vsub.f32 0.0, %v1378
    %v1384 = vsub.f32 0.0, %v1381
    %vm1388 = vcmask 1045504
    %v1389 = vrot.slane %v1382, 2
    %v1390 = vrot.slane %v1383, 2
    %v1391 = vsel %vm1388, %v1389, %v1390
    %v1392 = vrot.slane %v1384, 2
    %v1393 = vsel %vm1388, %v1390, %v1392
    %v1396 = vadd.f32 %v1391, %v1393
    %v1397 = vrot.slane %v1396, 4
    %v1398 = vadd.f32 %v1396, %v1397
    %v1399 = vrot.slane %v1398, 2
    %v1400 = vadd.f32 %v1398, %v1399
    %v1401 = vrot.slane %v1400, 1
    %v1402 = vadd.f32 %v1400, %v1401
    %v1403 = vsel %vm1373, %v1306, 0.0
    %1404 = vadd.xlane.f32.xlu0 %v1403
    %v1405 = vpop.xlane.xlu0 %1404
    %1406 = vadd.xlane.f32.xlu0 %v1307
    %v1407 = vpop.xlane.xlu0 %1406
    %v1408 = vsel %vm1309, %v1308, 0.0
    %1409 = vadd.xlane.f32.xlu0 %v1408
    %v1410 = vpop.xlane.xlu0 %1409
    %v1414 = vrot.slane %v1405, 2
    %v1415 = vrot.slane %v1407, 2
    %v1416 = vsel %vm1388, %v1414, %v1415
    %v1417 = vrot.slane %v1410, 2
    %v1418 = vsel %vm1388, %v1415, %v1417
    %v1421 = vadd.f32 %v1416, %v1418
    %v1422 = vrot.slane %v1421, 4
    %v1423 = vadd.f32 %v1421, %v1422
    %v1424 = vrot.slane %v1423, 2
    %v1425 = vadd.f32 %v1423, %v1424
    %v1426 = vrot.slane %v1425, 1
    %v1427 = vadd.f32 %v1425, %v1426
    %v1428 = vmax.f32 %v1427, 1.0
    %v1429 = vrcp.pop %v1428
    %v1430 = vmul.f32 %v1428, %v1429
    %v1431 = vsub.f32 1.0, %v1430
    %v1432 = vmul.f32 %v1429, %v1431
    %v1433 = vadd.f32 %v1429, %v1432
    %vm1434 = vweird.f32 %v1428
    %vm1435 = vweird.f32 %v1429
    %vm1436 = vmor %vm1434, %vm1435
    %v1437 = vsel %vm1436, %v1429, %v1433
    %v1438 = vand.u32 2147483647, %v1428
    %vm1439 = vcmp.eq.f32.partialorder %v1438, 8.507059e+37
    %v1440 = vand.u32 %v1428, 2147483648
    %v1441 = vor.u32 1.1754944e-38, %v1440
    %v1442 = vsel %vm1439, %v1441, %v1437
    %v1443 = vmul.f32 %v1402, %v1442
    %v1444 = vlaneseq
    %v1445 = vand.u32 %v1444, 127
    %vm1446 = vcmp.eq.s32.totalorder %v1445, 0
    %vm1447 = vcmp.eq.s32.totalorder %v1445, 1
    %v1448 = vsel %vm1447, %v1443, 0.0
    %v1449 = vsel %vm1446, %v1341, %v1448
    %v1451 = vrot.slane %v1270, 7
    %vm1455 = vcmask 1042432
    %v1456 = vrot.slane %v1301, 5
    %v1457 = vrot.slane %v1304, 5
    %v1458 = vsel %vm1455, %v1456, %v1457
    %vm1462 = vcmask 1040384
    %v1463 = vsel %vm1462, %v1449, %v1451
    %v1464 = vsel %vm1455, %v1463, %v1456
    %1465 = vst [vmem:[#allocation8] sm:$0xff] %v1464
    %1466 = vst [vmem:[#allocation8 + $0x8] sm:$0xff] %v1458
    %1467 = vst [vmem:[#allocation8 + $0x10] sm:$0x7] %v1457
    // Predicated region
    $region54: #{tpu_custom_call.1} parent=1 // pred_check
      _
    $region55: #{tpu_custom_call.1} parent=1 // pred_check_branch
      %1469 = sbr.rel (0) target = $region57
    $region56: #{tpu_custom_call.1} parent=1 // pred_region
      %1471 = vsyncadd [#allocation4], 0
      %s1472 = sshll.u32 [#allocation8], 4
      %s1473 = int_to_ptr.vmem [resolvable:$true] %s1472
      %s1474 = sshll.u32 %s10, 4
      %s1475 = int_to_ptr.hbm [resolvable:$true] %s1474
      %1480 = dma.vmem_to_hbm [thread:$0]  %s1473, 384, %s1475, [#allocation4], 128, 128, 8
    $region57: #{tpu_custom_call.1} parent=1 // pred_fallthru
      _
    // Predicated region
    $region58: #{tpu_custom_call.1} parent=1 // pred_check
      _
    $region59: #{tpu_custom_call.1} parent=1 // pred_check_branch
      %1482 = sbr.rel (0) target = $region61
    $region60: #{tpu_custom_call.1} parent=1 // pred_region
      %1484 = dma.done [#allocation4], 384
    $region61: #{tpu_custom_call.1} parent=1 // pred_fallthru
      _
    %1485 = vsyncpa [#allocation3], 1
    %1486 = vsyncpa [#allocation6], 1
    %1487 = vsyncpa [#allocation4], 1

</llo_original>
